<compile_context>
chip_gen: v5e
topology: v5e:2x2
jax: 0.10.0
libtpu: 0.0.40
codegen_flags: <defaults>
</compile_context>

<pallas_src>
import jax
import jax.numpy as jnp
from jax.experimental import pallas as pl
from jax.experimental.pallas import tpu as pltpu


# ---------------- fused Pallas kernel ----------------

def _dqn_fused_kernel(x_ref, w1_ref, w2_ref, wfc_ref, b_ref, o_ref):
    f32 = jnp.float32
    bf16 = jnp.bfloat16

    N, H, WC = x_ref.shape          # (2, 10, 60); WC = W * Cin (kw/cin on the lane axis)
    KH = w1_ref.shape[0]            # 3
    L1 = w1_ref.shape[2]            # 128 = Wo1 * C1
    L2 = w2_ref.shape[2]            # 192 = Wo2 * C2
    Ho1 = H - (KH - 1)              # 8
    Ho2 = Ho1 - (KH - 1)            # 6
    A = wfc_ref.shape[2]            # 6

    # packed bias row: [fc_b padded to 128 | conv1_b tiled over Wo1 | conv2_b tiled over Wo2]
    off1 = b_ref.shape[1] - L1 - L2
    bfc = b_ref[:, 0:A]                              # (1, 6)
    b1row = b_ref[:, off1:off1 + L1]                 # (1, 128)
    b2row = b_ref[:, off1 + L1:off1 + L1 + L2]       # (1, 192)

    x = x_ref[...].astype(bf16)                      # (N, H, W*Cin)

    # ---- conv1: 3 banded MXU dots (one per kernel row); output lane = wo*C1 + c1.
    acc1 = jnp.zeros((N * Ho1, L1), f32)
    for kh in range(KH):
        lhs = x[:, kh:kh + Ho1, :].reshape(N * Ho1, WC)
        acc1 = acc1 + jnp.dot(lhs, w1_ref[kh], preferred_element_type=f32)
    a1 = jnp.maximum(acc1 + b1row, 0.0).astype(bf16).reshape(N, Ho1, L1)

    # ---- conv2: 3 banded dots on kh-sliced windows of a1 (no scratch round trip).
    acc2 = jnp.zeros((N * Ho2, L2), f32)
    for kh in range(KH):
        lhs = a1[:, kh:kh + Ho2, :].reshape(N * Ho2, L1)
        acc2 = acc2 + jnp.dot(lhs, w2_ref[kh], preferred_element_type=f32)
    a2 = jnp.maximum(acc2 + b2row, 0.0).astype(bf16).reshape(N, Ho2, L2)

    # ---- Linear(1152 -> 6): NCHW flatten absorbed into wfc; 6 accumulated K=192 dots.
    logits = jnp.zeros((N, A), f32) + bfc
    for h in range(Ho2):
        logits = logits + jnp.dot(a2[:, h, :], wfc_ref[h], preferred_element_type=f32)

    # ---- softmax(dim=1), numerically stable, exact division.
    mx = jnp.max(logits, axis=-1, keepdims=True)
    e = jnp.exp(logits - mx)
    o_ref[...] = e / jnp.sum(e, axis=-1, keepdims=True)


# ---------------- parameter preparation (one-time, outside the hot path) ----------------

def _banded_conv_weight(w_oihw, w_in, w_out):
    """(Cout, Cin, 3, 3) torch conv weight -> (KH, w_in*Cin, w_out*Cout) banded matrix.

    Row = w*Cin + ci of the lane-folded input row, col = wo*Cout + co of the output
    row, zeros off the 3-tap band.  One MXU dot per kernel row then computes every
    output column at once (im2col lives inside the weight, not the activations)."""
    cout, cin, kh, kw = w_oihw.shape
    wk = jnp.transpose(w_oihw, (2, 3, 1, 0))            # (KH, KW, Cin, Cout)
    out = jnp.zeros((kh, w_in * cin, w_out * cout), jnp.float32)
    for r in range(kh):
        for wo in range(w_out):
            for k in range(kw):
                out = out.at[r,
                             (wo + k) * cin:(wo + k + 1) * cin,
                             wo * cout:(wo + 1) * cout].set(wk[r, k])
    return out


def prepare_params(params):
    """Re-layout PyTorch-style parameters once so the kernel sees pre-packed weights."""
    c1 = params['conv1_w']      # (16, 6, 3, 3)   (Cout, Cin, KH, KW)
    c2 = params['conv2_w']      # (32, 16, 3, 3)
    fc = params['fc_w']         # (6, 1152)
    c2out = c2.shape[0]
    a = fc.shape[0]
    wo2 = int(round((fc.shape[1] // c2out) ** 0.5))     # 6
    wo1 = wo2 + 2                                       # 8
    w_in = wo1 + 2                                      # 10

    w1b = _banded_conv_weight(c1, w_in, wo1).astype(jnp.bfloat16)   # (3, 60, 128)
    w2b = _banded_conv_weight(c2, wo1, wo2).astype(jnp.bfloat16)    # (3, 128, 192)

    # fc_w[a, c*36 + h*6 + w]  ->  wfc[h, w*C2 + c, a]  (absorbs the NCHW flatten)
    wfc = jnp.transpose(fc.reshape(a, c2out, wo2, wo2), (2, 3, 1, 0))
    wfc = wfc.reshape(wo2, wo2 * c2out, a).astype(jnp.bfloat16)     # (6, 192, 6)

    # one packed bias row: [fc_b padded to 128 | conv1_b tiled | conv2_b tiled]
    pad_fc = jnp.zeros((128,), jnp.float32).at[:a].set(params['fc_b'].astype(jnp.float32))
    b1row = jnp.tile(params['conv1_b'].astype(jnp.float32), (wo1,))     # (128,)
    b2row = jnp.tile(params['conv2_b'].astype(jnp.float32), (wo2,))     # (192,)
    biases = jnp.concatenate([pad_fc, b1row, b2row])[None, :]           # (1, 448)

    return {'w1b': w1b, 'w2b': w2b, 'wfc': wfc, 'biases': biases}


# ---------------- forward (hot path: one transpose/reshape + one fused pallas_call) ----------------

@jax.jit
def dqn_forward(prep, x_nchw):
    n, c, h, w = x_nchw.shape
    # lone remaining XLA glue op: NCHW -> (N, H, W*Cin) so kw/cin are lane-contiguous.
    x = jnp.transpose(x_nchw, (0, 2, 3, 1)).reshape(n, h, w * c).astype(jnp.float32)
    acts = prep['wfc'].shape[2]
    vmem = pl.BlockSpec(memory_space=pltpu.MemorySpace.VMEM)
    return pl.pallas_call(
        _dqn_fused_kernel,
        out_shape=jax.ShapeDtypeStruct((n, acts), jnp.float32),
        in_specs=[vmem] * 5,
        out_specs=vmem,
    )(x, prep['w1b'], prep['w2b'], prep['wfc'], prep['biases'])


# ---------------- pure-JAX reference (for correctness check only) ----------------

def dqn_reference(params, x_nchw):
    prec = jax.lax.Precision.HIGHEST
    y = jax.lax.conv_general_dilated(
        x_nchw, params['conv1_w'], window_strides=(1, 1), padding='VALID',
        dimension_numbers=('NCHW', 'OIHW', 'NCHW'), precision=prec)
    y = jnp.maximum(y + params['conv1_b'][None, :, None, None], 0.0)
    y = jax.lax.conv_general_dilated(
        y, params['conv2_w'], window_strides=(1, 1), padding='VALID',
        dimension_numbers=('NCHW', 'OIHW', 'NCHW'), precision=prec)
    y = jnp.maximum(y + params['conv2_b'][None, :, None, None], 0.0)
    y = y.reshape(y.shape[0], -1)                                   # PyTorch x.view(N, -1)
    logits = jnp.dot(y, params['fc_w'].T, precision=prec) + params['fc_b']
    return jax.nn.softmax(logits, axis=1)


def init_params(key):
    ks = jax.random.split(key, 6)

    def u(k, shape):
        return jax.random.uniform(k, shape, jnp.float32, -0.2, 0.2)

    return {
        'conv1_w': u(ks[0], (16, 6, 3, 3)),
        'conv1_b': u(ks[1], (16,)),
        'conv2_w': u(ks[2], (32, 16, 3, 3)),
        'conv2_b': u(ks[3], (32,)),
        'fc_w':    u(ks[4], (6, 1152)),
        'fc_b':    u(ks[5], (6,)),
    }


if __name__ == "__main__":
    key = jax.random.PRNGKey(0)
    pkey, xkey = jax.random.split(key)
    params = init_params(pkey)
    prep = prepare_params(params)

    # Linear(1152, 6) with 32 channels after conv2 implies 6x6 spatial, hence 10x10 input.
    x = jax.random.normal(xkey, (2, 6, 10, 10), dtype=jnp.float32)

    out = dqn_forward(prep, x)
    out = jax.block_until_ready(out)

    assert out.shape == (2, 6)
    assert bool(jnp.all(jnp.isfinite(out)))
    assert bool(jnp.allclose(jnp.sum(out, axis=1), 1.0, atol=1e-5))

    ref = dqn_reference(params, x)
    assert bool(jnp.allclose(out, ref, atol=2e-2))

    print("KERNEL_OK")
</pallas_src>

<mosaic_0001>
module attributes {stable_mosaic.version = 11 : i64} {
  func.func @_dqn_fused_kernel(%arg0: memref<2x10x60xf32, #tpu.memory_space<vmem>>, %arg1: memref<3x60x128xbf16, #tpu.memory_space<vmem>>, %arg2: memref<3x128x192xbf16, #tpu.memory_space<vmem>>, %arg3: memref<6x192x6xbf16, #tpu.memory_space<vmem>>, %arg4: memref<1x448xf32, #tpu.memory_space<vmem>>, %arg5: memref<2x6xf32, #tpu.memory_space<vmem>>) attributes {dimension_semantics = [], scalar_prefetch = 0 : i64, scratch_operands = 0 : i64, tpu.core_type = #tpu.core_type<tc>} {
    %c0 = arith.constant 0 : index
    %c0_0 = arith.constant 0 : index
    %0 = vector.load %arg4[%c0, %c0_0] : memref<1x448xf32, #tpu.memory_space<vmem>>, vector<1x6xf32>
    %c0_1 = arith.constant 0 : index
    %c128 = arith.constant 128 : index
    %1 = vector.load %arg4[%c0_1, %c128] : memref<1x448xf32, #tpu.memory_space<vmem>>, vector<1x128xf32>
    %c0_2 = arith.constant 0 : index
    %c256 = arith.constant 256 : index
    %2 = vector.load %arg4[%c0_2, %c256] : memref<1x448xf32, #tpu.memory_space<vmem>>, vector<1x192xf32>
    %c0_3 = arith.constant 0 : index
    %c0_4 = arith.constant 0 : index
    %c0_5 = arith.constant 0 : index
    %3 = vector.load %arg0[%c0_3, %c0_4, %c0_5] : memref<2x10x60xf32, #tpu.memory_space<vmem>>, vector<2x10x60xf32>
    %4 = arith.truncf %3 : vector<2x10x60xf32> to vector<2x10x60xbf16>
    %cst = arith.constant 0.000000e+00 : f32
    %5 = vector.broadcast %cst : f32 to vector<16x128xf32>
    %6 = vector.extract_strided_slice %4 {offsets = [0, 0, 0], sizes = [2, 8, 60], strides = [1, 1, 1]} : vector<2x10x60xbf16> to vector<2x8x60xbf16>
    %7 = vector.shape_cast %6 : vector<2x8x60xbf16> to vector<16x60xbf16>
    %c0_6 = arith.constant 0 : index
    %c0_7 = arith.constant 0 : index
    %c0_8 = arith.constant 0 : index
    %8 = vector.load %arg1[%c0_6, %c0_7, %c0_8] : memref<3x60x128xbf16, #tpu.memory_space<vmem>>, vector<1x60x128xbf16>
    %9 = vector.shape_cast %8 : vector<1x60x128xbf16> to vector<60x128xbf16>
    %cst_9 = arith.constant dense<0.000000e+00> : vector<16x128xf32>
    %10 = tpu.matmul %7, %9, %cst_9 {dimension_numbers = #tpu.dot_dimension_numbers<[1], [0], [0], [1], [0, 0, 1, 1], [], []>} : vector<16x60xbf16>, vector<60x128xbf16>, vector<16x128xf32> -> vector<16x128xf32>
    %11 = arith.addf %5, %10 : vector<16x128xf32>
    %12 = vector.extract_strided_slice %4 {offsets = [0, 1, 0], sizes = [2, 8, 60], strides = [1, 1, 1]} : vector<2x10x60xbf16> to vector<2x8x60xbf16>
    %13 = vector.shape_cast %12 : vector<2x8x60xbf16> to vector<16x60xbf16>
    %c1 = arith.constant 1 : index
    %c0_10 = arith.constant 0 : index
    %c0_11 = arith.constant 0 : index
    %14 = vector.load %arg1[%c1, %c0_10, %c0_11] : memref<3x60x128xbf16, #tpu.memory_space<vmem>>, vector<1x60x128xbf16>
    %15 = vector.shape_cast %14 : vector<1x60x128xbf16> to vector<60x128xbf16>
    %cst_12 = arith.constant dense<0.000000e+00> : vector<16x128xf32>
    %16 = tpu.matmul %13, %15, %cst_12 {dimension_numbers = #tpu.dot_dimension_numbers<[1], [0], [0], [1], [0, 0, 1, 1], [], []>} : vector<16x60xbf16>, vector<60x128xbf16>, vector<16x128xf32> -> vector<16x128xf32>
    %17 = arith.addf %11, %16 : vector<16x128xf32>
    %18 = vector.extract_strided_slice %4 {offsets = [0, 2, 0], sizes = [2, 8, 60], strides = [1, 1, 1]} : vector<2x10x60xbf16> to vector<2x8x60xbf16>
    %19 = vector.shape_cast %18 : vector<2x8x60xbf16> to vector<16x60xbf16>
    %c2 = arith.constant 2 : index
    %c0_13 = arith.constant 0 : index
    %c0_14 = arith.constant 0 : index
    %20 = vector.load %arg1[%c2, %c0_13, %c0_14] : memref<3x60x128xbf16, #tpu.memory_space<vmem>>, vector<1x60x128xbf16>
    %21 = vector.shape_cast %20 : vector<1x60x128xbf16> to vector<60x128xbf16>
    %cst_15 = arith.constant dense<0.000000e+00> : vector<16x128xf32>
    %22 = tpu.matmul %19, %21, %cst_15 {dimension_numbers = #tpu.dot_dimension_numbers<[1], [0], [0], [1], [0, 0, 1, 1], [], []>} : vector<16x60xbf16>, vector<60x128xbf16>, vector<16x128xf32> -> vector<16x128xf32>
    %23 = arith.addf %17, %22 : vector<16x128xf32>
    %24 = vector.broadcast %1 : vector<1x128xf32> to vector<16x128xf32>
    %25 = arith.addf %23, %24 : vector<16x128xf32>
    %cst_16 = arith.constant 0.000000e+00 : f32
    %26 = vector.broadcast %cst_16 : f32 to vector<16x128xf32>
    %27 = arith.maximumf %25, %26 : vector<16x128xf32>
    %28 = arith.truncf %27 : vector<16x128xf32> to vector<16x128xbf16>
    %29 = vector.shape_cast %28 : vector<16x128xbf16> to vector<2x8x128xbf16>
    %cst_17 = arith.constant 0.000000e+00 : f32
    %30 = vector.broadcast %cst_17 : f32 to vector<12x192xf32>
    %31 = vector.extract_strided_slice %29 {offsets = [0, 0, 0], sizes = [2, 6, 128], strides = [1, 1, 1]} : vector<2x8x128xbf16> to vector<2x6x128xbf16>
    %32 = vector.shape_cast %31 : vector<2x6x128xbf16> to vector<12x128xbf16>
    %c0_18 = arith.constant 0 : index
    %c0_19 = arith.constant 0 : index
    %c0_20 = arith.constant 0 : index
    %33 = vector.load %arg2[%c0_18, %c0_19, %c0_20] : memref<3x128x192xbf16, #tpu.memory_space<vmem>>, vector<1x128x192xbf16>
    %34 = vector.shape_cast %33 : vector<1x128x192xbf16> to vector<128x192xbf16>
    %cst_21 = arith.constant dense<0.000000e+00> : vector<12x192xf32>
    %35 = tpu.matmul %32, %34, %cst_21 {dimension_numbers = #tpu.dot_dimension_numbers<[1], [0], [0], [1], [0, 0, 1, 1], [], []>} : vector<12x128xbf16>, vector<128x192xbf16>, vector<12x192xf32> -> vector<12x192xf32>
    %36 = arith.addf %30, %35 : vector<12x192xf32>
    %37 = vector.extract_strided_slice %29 {offsets = [0, 1, 0], sizes = [2, 6, 128], strides = [1, 1, 1]} : vector<2x8x128xbf16> to vector<2x6x128xbf16>
    %38 = vector.shape_cast %37 : vector<2x6x128xbf16> to vector<12x128xbf16>
    %c1_22 = arith.constant 1 : index
    %c0_23 = arith.constant 0 : index
    %c0_24 = arith.constant 0 : index
    %39 = vector.load %arg2[%c1_22, %c0_23, %c0_24] : memref<3x128x192xbf16, #tpu.memory_space<vmem>>, vector<1x128x192xbf16>
    %40 = vector.shape_cast %39 : vector<1x128x192xbf16> to vector<128x192xbf16>
    %cst_25 = arith.constant dense<0.000000e+00> : vector<12x192xf32>
    %41 = tpu.matmul %38, %40, %cst_25 {dimension_numbers = #tpu.dot_dimension_numbers<[1], [0], [0], [1], [0, 0, 1, 1], [], []>} : vector<12x128xbf16>, vector<128x192xbf16>, vector<12x192xf32> -> vector<12x192xf32>
    %42 = arith.addf %36, %41 : vector<12x192xf32>
    %43 = vector.extract_strided_slice %29 {offsets = [0, 2, 0], sizes = [2, 6, 128], strides = [1, 1, 1]} : vector<2x8x128xbf16> to vector<2x6x128xbf16>
    %44 = vector.shape_cast %43 : vector<2x6x128xbf16> to vector<12x128xbf16>
    %c2_26 = arith.constant 2 : index
    %c0_27 = arith.constant 0 : index
    %c0_28 = arith.constant 0 : index
    %45 = vector.load %arg2[%c2_26, %c0_27, %c0_28] : memref<3x128x192xbf16, #tpu.memory_space<vmem>>, vector<1x128x192xbf16>
    %46 = vector.shape_cast %45 : vector<1x128x192xbf16> to vector<128x192xbf16>
    %cst_29 = arith.constant dense<0.000000e+00> : vector<12x192xf32>
    %47 = tpu.matmul %44, %46, %cst_29 {dimension_numbers = #tpu.dot_dimension_numbers<[1], [0], [0], [1], [0, 0, 1, 1], [], []>} : vector<12x128xbf16>, vector<128x192xbf16>, vector<12x192xf32> -> vector<12x192xf32>
    %48 = arith.addf %42, %47 : vector<12x192xf32>
    %49 = vector.broadcast %2 : vector<1x192xf32> to vector<12x192xf32>
    %50 = arith.addf %48, %49 : vector<12x192xf32>
    %cst_30 = arith.constant 0.000000e+00 : f32
    %51 = vector.broadcast %cst_30 : f32 to vector<12x192xf32>
    %52 = arith.maximumf %50, %51 : vector<12x192xf32>
    %53 = arith.truncf %52 : vector<12x192xf32> to vector<12x192xbf16>
    %54 = vector.shape_cast %53 : vector<12x192xbf16> to vector<2x6x192xbf16>
    %cst_31 = arith.constant 0.000000e+00 : f32
    %55 = vector.broadcast %cst_31 : f32 to vector<2x6xf32>
    %56 = vector.broadcast %0 : vector<1x6xf32> to vector<2x6xf32>
    %57 = arith.addf %55, %56 : vector<2x6xf32>
    %58 = vector.extract_strided_slice %54 {offsets = [0, 0, 0], sizes = [2, 1, 192], strides = [1, 1, 1]} : vector<2x6x192xbf16> to vector<2x1x192xbf16>
    %59 = vector.shape_cast %58 : vector<2x1x192xbf16> to vector<2x192xbf16>
    %c0_32 = arith.constant 0 : index
    %c0_33 = arith.constant 0 : index
    %c0_34 = arith.constant 0 : index
    %60 = vector.load %arg3[%c0_32, %c0_33, %c0_34] : memref<6x192x6xbf16, #tpu.memory_space<vmem>>, vector<1x192x6xbf16>
    %61 = vector.shape_cast %60 : vector<1x192x6xbf16> to vector<192x6xbf16>
    %cst_35 = arith.constant dense<0.000000e+00> : vector<2x6xf32>
    %62 = tpu.matmul %59, %61, %cst_35 {dimension_numbers = #tpu.dot_dimension_numbers<[1], [0], [0], [1], [0, 0, 1, 1], [], []>} : vector<2x192xbf16>, vector<192x6xbf16>, vector<2x6xf32> -> vector<2x6xf32>
    %63 = arith.addf %57, %62 : vector<2x6xf32>
    %64 = vector.extract_strided_slice %54 {offsets = [0, 1, 0], sizes = [2, 1, 192], strides = [1, 1, 1]} : vector<2x6x192xbf16> to vector<2x1x192xbf16>
    %65 = vector.shape_cast %64 : vector<2x1x192xbf16> to vector<2x192xbf16>
    %c1_36 = arith.constant 1 : index
    %c0_37 = arith.constant 0 : index
    %c0_38 = arith.constant 0 : index
    %66 = vector.load %arg3[%c1_36, %c0_37, %c0_38] : memref<6x192x6xbf16, #tpu.memory_space<vmem>>, vector<1x192x6xbf16>
    %67 = vector.shape_cast %66 : vector<1x192x6xbf16> to vector<192x6xbf16>
    %cst_39 = arith.constant dense<0.000000e+00> : vector<2x6xf32>
    %68 = tpu.matmul %65, %67, %cst_39 {dimension_numbers = #tpu.dot_dimension_numbers<[1], [0], [0], [1], [0, 0, 1, 1], [], []>} : vector<2x192xbf16>, vector<192x6xbf16>, vector<2x6xf32> -> vector<2x6xf32>
    %69 = arith.addf %63, %68 : vector<2x6xf32>
    %70 = vector.extract_strided_slice %54 {offsets = [0, 2, 0], sizes = [2, 1, 192], strides = [1, 1, 1]} : vector<2x6x192xbf16> to vector<2x1x192xbf16>
    %71 = vector.shape_cast %70 : vector<2x1x192xbf16> to vector<2x192xbf16>
    %c2_40 = arith.constant 2 : index
    %c0_41 = arith.constant 0 : index
    %c0_42 = arith.constant 0 : index
    %72 = vector.load %arg3[%c2_40, %c0_41, %c0_42] : memref<6x192x6xbf16, #tpu.memory_space<vmem>>, vector<1x192x6xbf16>
    %73 = vector.shape_cast %72 : vector<1x192x6xbf16> to vector<192x6xbf16>
    %cst_43 = arith.constant dense<0.000000e+00> : vector<2x6xf32>
    %74 = tpu.matmul %71, %73, %cst_43 {dimension_numbers = #tpu.dot_dimension_numbers<[1], [0], [0], [1], [0, 0, 1, 1], [], []>} : vector<2x192xbf16>, vector<192x6xbf16>, vector<2x6xf32> -> vector<2x6xf32>
    %75 = arith.addf %69, %74 : vector<2x6xf32>
    %76 = vector.extract_strided_slice %54 {offsets = [0, 3, 0], sizes = [2, 1, 192], strides = [1, 1, 1]} : vector<2x6x192xbf16> to vector<2x1x192xbf16>
    %77 = vector.shape_cast %76 : vector<2x1x192xbf16> to vector<2x192xbf16>
    %c3 = arith.constant 3 : index
    %c0_44 = arith.constant 0 : index
    %c0_45 = arith.constant 0 : index
    %78 = vector.load %arg3[%c3, %c0_44, %c0_45] : memref<6x192x6xbf16, #tpu.memory_space<vmem>>, vector<1x192x6xbf16>
    %79 = vector.shape_cast %78 : vector<1x192x6xbf16> to vector<192x6xbf16>
    %cst_46 = arith.constant dense<0.000000e+00> : vector<2x6xf32>
    %80 = tpu.matmul %77, %79, %cst_46 {dimension_numbers = #tpu.dot_dimension_numbers<[1], [0], [0], [1], [0, 0, 1, 1], [], []>} : vector<2x192xbf16>, vector<192x6xbf16>, vector<2x6xf32> -> vector<2x6xf32>
    %81 = arith.addf %75, %80 : vector<2x6xf32>
    %82 = vector.extract_strided_slice %54 {offsets = [0, 4, 0], sizes = [2, 1, 192], strides = [1, 1, 1]} : vector<2x6x192xbf16> to vector<2x1x192xbf16>
    %83 = vector.shape_cast %82 : vector<2x1x192xbf16> to vector<2x192xbf16>
    %c4 = arith.constant 4 : index
    %c0_47 = arith.constant 0 : index
    %c0_48 = arith.constant 0 : index
    %84 = vector.load %arg3[%c4, %c0_47, %c0_48] : memref<6x192x6xbf16, #tpu.memory_space<vmem>>, vector<1x192x6xbf16>
    %85 = vector.shape_cast %84 : vector<1x192x6xbf16> to vector<192x6xbf16>
    %cst_49 = arith.constant dense<0.000000e+00> : vector<2x6xf32>
    %86 = tpu.matmul %83, %85, %cst_49 {dimension_numbers = #tpu.dot_dimension_numbers<[1], [0], [0], [1], [0, 0, 1, 1], [], []>} : vector<2x192xbf16>, vector<192x6xbf16>, vector<2x6xf32> -> vector<2x6xf32>
    %87 = arith.addf %81, %86 : vector<2x6xf32>
    %88 = vector.extract_strided_slice %54 {offsets = [0, 5, 0], sizes = [2, 1, 192], strides = [1, 1, 1]} : vector<2x6x192xbf16> to vector<2x1x192xbf16>
    %89 = vector.shape_cast %88 : vector<2x1x192xbf16> to vector<2x192xbf16>
    %c5 = arith.constant 5 : index
    %c0_50 = arith.constant 0 : index
    %c0_51 = arith.constant 0 : index
    %90 = vector.load %arg3[%c5, %c0_50, %c0_51] : memref<6x192x6xbf16, #tpu.memory_space<vmem>>, vector<1x192x6xbf16>
    %91 = vector.shape_cast %90 : vector<1x192x6xbf16> to vector<192x6xbf16>
    %cst_52 = arith.constant dense<0.000000e+00> : vector<2x6xf32>
    %92 = tpu.matmul %89, %91, %cst_52 {dimension_numbers = #tpu.dot_dimension_numbers<[1], [0], [0], [1], [0, 0, 1, 1], [], []>} : vector<2x192xbf16>, vector<192x6xbf16>, vector<2x6xf32> -> vector<2x6xf32>
    %93 = arith.addf %87, %92 : vector<2x6xf32>
    %cst_53 = arith.constant dense<0xFF800000> : vector<2xf32>
    %94 = vector.multi_reduction <maximumf>, %93, %cst_53 [1] : vector<2x6xf32> to vector<2xf32>
    %95 = vector.shape_cast %94 : vector<2xf32> to vector<2x1xf32>
    %96 = vector.broadcast %95 : vector<2x1xf32> to vector<2x6xf32>
    %97 = arith.subf %93, %96 : vector<2x6xf32>
    %98 = math.exp %97 : vector<2x6xf32>
    %cst_54 = arith.constant dense<0.000000e+00> : vector<2xf32>
    %99 = vector.multi_reduction <add>, %98, %cst_54 [1] : vector<2x6xf32> to vector<2xf32>
    %100 = vector.shape_cast %99 : vector<2xf32> to vector<2x1xf32>
    %101 = vector.broadcast %100 : vector<2x1xf32> to vector<2x6xf32>
    %102 = arith.divf %98, %101 : vector<2x6xf32>
    %c0_55 = arith.constant 0 : index
    %c0_56 = arith.constant 0 : index
    %103 = vector.load %arg5[%c0_55, %c0_56] : memref<2x6xf32, #tpu.memory_space<vmem>>, vector<2x6xf32>
    tpu.vector_store %arg5[%c0_55, %c0_56], %102 {strides = array<i32>} : memref<2x6xf32, #tpu.memory_space<vmem>>, vector<2x6xf32>,
    return
  }
}

</mosaic_0001>

<llo_original>
// kernel: dqn_forward.1
$region0: #{dqn_forward.1}
  #allocation0 [shape = 'u32[]', space=smem, size = 0x4, offset = 0x4, fixed_abs, tag = 'smem constant byte address 0x4 - core index']
  #allocation1 [shape = 'u32[72,128]{1,0:T(1,128)}', space=vmem, size = 0x9000, scoped, tag = 'internal scratch']
  %s0 = inlined_call_operand.vmem [shape: f32[2,10,60], index: 0, kind: input, shape index: {}]
  %s1 = inlined_call_operand.vmem [shape: bf16[3,60,128], index: 1, kind: input, shape index: {}]
  %s2 = inlined_call_operand.vmem [shape: bf16[3,128,192], index: 2, kind: input, shape index: {}]
  %s3 = inlined_call_operand.vmem [shape: bf16[6,192,6], index: 3, kind: input, shape index: {}]
  %s4 = inlined_call_operand.vmem [shape: f32[1,448], index: 4, kind: input, shape index: {}]
  %s5 = inlined_call_operand.hbm [shape: f32[2,6], index: 5, kind: output, shape index: {}]
  %s6 = sld [smem:[#allocation0]]
  $region30: #{dqn_forward.1} parent=0
    _
  %s8 = ssub.s32 1, %s6
  %s9 = scalar_select 0, %s8, %s6
  $region1: #{dqn_forward.1} parent=0
    #allocation2 [shape = 'u8[1024]{0}', space=vmem, size = 0x400, scoped, tag = 'output window, operand 0, single buffered']
    #allocation3 [shape = 's32[1]{0}', space=sflag, size = 0x4, scoped, tag = 'scoped memory for dqn_forward.1']
    %10 = vsyncpa [#allocation3], 0
    // Predicated region
    $region2: #{dqn_forward.1} parent=1 // pred_check
      _
    $region3: #{dqn_forward.1} parent=1 // pred_check_branch
      %12 = sbr.rel (0) target = $region5
    $region4: #{dqn_forward.1} parent=1 // pred_region
      _
    $region5: #{dqn_forward.1} parent=1 // pred_fallthru
      _
    // Predicated region
    $region6: #{dqn_forward.1} parent=1 // pred_check
      _
    $region7: #{dqn_forward.1} parent=1 // pred_check_branch
      %14 = sbr.rel (0) target = $region9
    $region8: #{dqn_forward.1} parent=1 // pred_region
      _
    $region9: #{dqn_forward.1} parent=1 // pred_fallthru
      _
    // Predicated region
    $region10: #{dqn_forward.1} parent=1 // pred_check
      _
    $region11: #{dqn_forward.1} parent=1 // pred_check_branch
      %16 = sbr.rel (0) target = $region13
    $region12: #{dqn_forward.1} parent=1 // pred_region
      _
    $region13: #{dqn_forward.1} parent=1 // pred_fallthru
      _
    // Predicated region
    $region14: #{dqn_forward.1} parent=1 // pred_check
      _
    $region15: #{dqn_forward.1} parent=1 // pred_check_branch
      %18 = sbr.rel (0) target = $region17
    $region16: #{dqn_forward.1} parent=1 // pred_region
      _
    $region17: #{dqn_forward.1} parent=1 // pred_fallthru
      _
    // Predicated region
    $region18: #{dqn_forward.1} parent=1 // pred_check
      _
    $region19: #{dqn_forward.1} parent=1 // pred_check_branch
      %20 = sbr.rel (0) target = $region21
    $region20: #{dqn_forward.1} parent=1 // pred_region
      _
    $region21: #{dqn_forward.1} parent=1 // pred_fallthru
      _
    %v22 = vld [vmem:[%s4] sm:$0x1]
    %v23 = vld [vmem:[%s4 + $0x1] sm:$0x1]
    %v24 = vld [vmem:[%s4 + $0x2] sm:$0x3]
    %v25 = vld [vmem:[%s0] sm:$0xff]
    %v26 = vld [vmem:[%s0 + $0x8] sm:$0x3]
    %v27 = vld [vmem:[%s0 + $0x10] sm:$0xff]
    %v28 = vld [vmem:[%s0 + $0x18] sm:$0x3]
    %v29 = vpack.c.bf16 %v25, %v25
    %v30 = vpack.c.bf16 %v26, %v26
    %v31 = vpack.c.bf16 %v27, %v27
    %v32 = vpack.c.bf16 %v28, %v28
    %v33 = vld [vmem:[%s1] sm:$0xf]
    %v34 = vld [vmem:[%s1 + $0x4] sm:$0xf]
    %v35 = vld [vmem:[%s1 + $0x8] sm:$0xf]
    %v36 = vld [vmem:[%s1 + $0xc] sm:$0xf]
    %v37 = vld [vmem:[%s1 + $0x10] sm:$0xf]
    %v38 = vld [vmem:[%s1 + $0x14] sm:$0xf]
    %v39 = vld [vmem:[%s1 + $0x18] sm:$0xf]
    %v40 = vld [vmem:[%s1 + $0x1c] sm:$0x3]
    %vm41 = vsmask.f32 3328
    %vm42 = vsmask.f32 7440
    %vm43 = vmor %vm41, %vm42
    %v45 = vshrl.u32 %v29, 16
    %v47 = vrot.slane %v45, 4
    %v48 = vshll.u32 %v29, 16
    %v50 = vrot.slane %v48, 5
    %v51 = vor.u32 %v47, %v50
    %v52 = vrot.slane %v51, 4
    %v54 = vshll.u32 %v30, 16
    %v56 = vrot.slane %v54, 5
    %v57 = vsel %vm43, %v52, %v56
    %v59 = vshrl.u32 %v31, 16
    %v61 = vrot.slane %v59, 4
    %v62 = vshll.u32 %v31, 16
    %v64 = vrot.slane %v62, 5
    %v65 = vor.u32 %v61, %v64
    %v66 = vrot.slane %v65, 4
    %v68 = vshll.u32 %v32, 16
    %v70 = vrot.slane %v68, 5
    %v71 = vsel %vm43, %v66, %v70
    %s72 = scalar_lea.vmem %s1, 32
    %v73 = vld [vmem:[%s72] sm:$0xf]
    %v74 = vld [vmem:[%s72 + $0x4] sm:$0xf]
    %v75 = vld [vmem:[%s72 + $0x8] sm:$0xf]
    %v76 = vld [vmem:[%s72 + $0xc] sm:$0xf]
    %v77 = vld [vmem:[%s72 + $0x10] sm:$0xf]
    %v78 = vld [vmem:[%s72 + $0x14] sm:$0xf]
    %v79 = vld [vmem:[%s72 + $0x18] sm:$0xf]
    %v80 = vld [vmem:[%s72 + $0x1c] sm:$0x3]
    %v81 = vunpack.c.l.b16 %v57
    %v82 = vunpack.c.l.b16 %v71
    %v83 = vpack.c.b16 %v82, %v81
    %v92 = vunpack.c.l.b16 %v73
    %v93 = vunpack.c.l.b16 %v74
    %v94 = vunpack.c.l.b16 %v75
    %v95 = vunpack.c.l.b16 %v76
    %v96 = vunpack.c.l.b16 %v77
    %v97 = vunpack.c.l.b16 %v78
    %v98 = vunpack.c.l.b16 %v79
    %v99 = vunpack.c.l.b16 %v80
    %v100 = vpack.c.b16 %v93, %v92
    %v101 = vpack.c.b16 %v95, %v94
    %v102 = vpack.c.b16 %v97, %v96
    %v103 = vpack.c.b16 %v99, %v98
    %vm107 = vcmask 490496
    %v109 = vsel %vm107, %v83, 0
    %vm111 = vcmask 1045504
    %v113 = vsel %vm111, %v103, 0
    %115 = vmatpush.bf16.msra.mxu0 0
    %116 = vmatpush.bf16.msra.mxu0 0
    %117 = vmatpush.bf16.msra.mxu0 0
    %118 = vmatpush.bf16.msra.mxu0 0
    %119 = vmatpush.bf16.msra.mxu0 %v113
    %120 = vmatpush.bf16.msra.mxu0 %v102
    %121 = vmatpush.bf16.msra.mxu0 %v101
    %122 = vmatpush.bf16.msra.mxu0 %v100
    %123 = vmatmul.bf16.gmra.mxu0 %v109
    %v124 = vpop.f32.mrf.mxu0
    %v125 = vadd.f32 0.0, %v124
    %v126 = vpop.f32.mrf.mxu0
    %v127 = vadd.f32 0.0, %v126
    %128 = vdwg.mxu0
    %v131 = vunpack.c.l.b16 %v29
    %v132 = vunpack.c.l.b16 %v31
    %v133 = vpack.c.b16 %v132, %v131
    %v142 = vunpack.c.l.b16 %v33
    %v143 = vunpack.c.l.b16 %v34
    %v144 = vunpack.c.l.b16 %v35
    %v145 = vunpack.c.l.b16 %v36
    %v146 = vunpack.c.l.b16 %v37
    %v147 = vunpack.c.l.b16 %v38
    %v148 = vunpack.c.l.b16 %v39
    %v149 = vunpack.c.l.b16 %v40
    %v150 = vpack.c.b16 %v143, %v142
    %v151 = vpack.c.b16 %v145, %v144
    %v152 = vpack.c.b16 %v147, %v146
    %v153 = vpack.c.b16 %v149, %v148
    %v158 = vsel %vm107, %v133, 0
    %v161 = vsel %vm111, %v153, 0
    %163 = vmatpush.bf16.msra.mxu0 0
    %164 = vmatpush.bf16.msra.mxu0 0
    %165 = vmatpush.bf16.msra.mxu0 0
    %166 = vmatpush.bf16.msra.mxu0 0
    %167 = vmatpush.bf16.msra.mxu0 %v161
    %168 = vmatpush.bf16.msra.mxu0 %v152
    %169 = vmatpush.bf16.msra.mxu0 %v151
    %170 = vmatpush.bf16.msra.mxu0 %v150
    %171 = vmatmul.bf16.gmra.mxu0 %v158
    %v172 = vpop.f32.mrf.mxu0
    %v173 = vadd.f32 %v125, %v172
    %v174 = vpop.f32.mrf.mxu0
    %v175 = vadd.f32 %v127, %v174
    %176 = vdwg.mxu0
    %vm179 = vcmask 1042432
    %vm180 = vcmask 1046532
    %vm181 = vmor %vm179, %vm180
    %v182 = vrot.slane %v29, 5
    %v183 = vrot.slane %v182, 4
    %v184 = vrot.slane %v30, 5
    %v185 = vsel %vm181, %v183, %v184
    %v186 = vrot.slane %v31, 5
    %v187 = vrot.slane %v186, 4
    %v188 = vrot.slane %v32, 5
    %v189 = vsel %vm181, %v187, %v188
    %s190 = scalar_lea.vmem %s1, 64
    %v191 = vld [vmem:[%s190] sm:$0xf]
    %v192 = vld [vmem:[%s190 + $0x4] sm:$0xf]
    %v193 = vld [vmem:[%s190 + $0x8] sm:$0xf]
    %v194 = vld [vmem:[%s190 + $0xc] sm:$0xf]
    %v195 = vld [vmem:[%s190 + $0x10] sm:$0xf]
    %v196 = vld [vmem:[%s190 + $0x14] sm:$0xf]
    %v197 = vld [vmem:[%s190 + $0x18] sm:$0xf]
    %v198 = vld [vmem:[%s190 + $0x1c] sm:$0x3]
    %v199 = vunpack.c.l.b16 %v185
    %v200 = vunpack.c.l.b16 %v189
    %v201 = vpack.c.b16 %v200, %v199
    %v210 = vunpack.c.l.b16 %v191
    %v211 = vunpack.c.l.b16 %v192
    %v212 = vunpack.c.l.b16 %v193
    %v213 = vunpack.c.l.b16 %v194
    %v214 = vunpack.c.l.b16 %v195
    %v215 = vunpack.c.l.b16 %v196
    %v216 = vunpack.c.l.b16 %v197
    %v217 = vunpack.c.l.b16 %v198
    %v218 = vpack.c.b16 %v211, %v210
    %v219 = vpack.c.b16 %v213, %v212
    %v220 = vpack.c.b16 %v215, %v214
    %v221 = vpack.c.b16 %v217, %v216
    %v226 = vsel %vm107, %v201, 0
    %v229 = vsel %vm111, %v221, 0
    %231 = vmatpush.bf16.msra.mxu0 0
    %232 = vmatpush.bf16.msra.mxu0 0
    %233 = vmatpush.bf16.msra.mxu0 0
    %234 = vmatpush.bf16.msra.mxu0 0
    %235 = vmatpush.bf16.msra.mxu0 %v229
    %236 = vmatpush.bf16.msra.mxu0 %v220
    %237 = vmatpush.bf16.msra.mxu0 %v219
    %238 = vmatpush.bf16.msra.mxu0 %v218
    %239 = vmatmul.bf16.gmra.mxu0 %v226
    %v240 = vpop.f32.mrf.mxu0
    %v241 = vadd.f32 0.0, %v240
    %v242 = vpop.f32.mrf.mxu0
    %v243 = vadd.f32 0.0, %v242
    %244 = vdwg.mxu0
    %v245 = vadd.f32 %v173, %v241
    %v246 = vadd.f32 %v175, %v243
    %v248 = vperm.slane %v23, 0
    %v250 = vadd.f32 %v245, %v248
    %v251 = vadd.f32 %v246, %v248
    %v252 = vmax.f32 %v250, 0.0
    %v253 = vmax.f32 %v251, 0.0
    %v254 = vpack.c.bf16 %v252, %v252
    %v255 = vpack.c.bf16 %v253, %v253
    %v258 = vrot.slane %v254, 3
    %v259 = vrot.slane %v255, 3
    %vm260 = vcmask 1040384
    %v263 = vsel %vm260, %v254, %v258
    %vm264 = vcmask 1041409
    %v265 = vsel %vm264, %v254, %v258
    %v267 = vrot.slane %v265, 1
    %vm268 = vcmask 1042434
    %v269 = vsel %vm268, %v254, %v258
    %v271 = vrot.slane %v269, 2
    %v274 = vsel %vm260, %v255, %v259
    %v275 = vsel %vm264, %v255, %v259
    %v277 = vrot.slane %v275, 1
    %v278 = vsel %vm268, %v255, %v259
    %v280 = vrot.slane %v278, 2
    %v281 = vld [vmem:[%s2] sm:$0xff]
    %v282 = vld [vmem:[%s2 + $0x8] sm:$0xff]
    %v283 = vld [vmem:[%s2 + $0x10] sm:$0xff]
    %v284 = vld [vmem:[%s2 + $0x18] sm:$0xff]
    %v285 = vld [vmem:[%s2 + $0x20] sm:$0xff]
    %v286 = vld [vmem:[%s2 + $0x28] sm:$0xff]
    %v287 = vld [vmem:[%s2 + $0x30] sm:$0xff]
    %v288 = vld [vmem:[%s2 + $0x38] sm:$0xff]
    %v289 = vld [vmem:[%s2 + $0x40] sm:$0xff]
    %v290 = vld [vmem:[%s2 + $0x48] sm:$0xff]
    %v291 = vld [vmem:[%s2 + $0x50] sm:$0xff]
    %v292 = vld [vmem:[%s2 + $0x58] sm:$0xff]
    %v293 = vld [vmem:[%s2 + $0x60] sm:$0xff]
    %v294 = vld [vmem:[%s2 + $0x68] sm:$0xff]
    %v295 = vld [vmem:[%s2 + $0x70] sm:$0xff]
    %v296 = vld [vmem:[%s2 + $0x78] sm:$0xff]
    %vm297 = vcmask 1043459
    %v298 = vsel %vm297, %v254, %v258
    %v300 = vrot.slane %v298, 3
    %v301 = vsel %vm297, %v255, %v259
    %v303 = vrot.slane %v301, 3
    %vm304 = vsmask.f32 256
    %vm305 = vsmask.f32 1284
    %vm306 = vmor %vm304, %vm305
    %vm307 = vsmask.f32 2312
    %vm308 = vmor %vm306, %vm307
    %vm309 = vsmask.f32 3340
    %vm310 = vmor %vm308, %vm309
    %vm311 = vsmask.f32 4368
    %vm312 = vmor %vm310, %vm311
    %vm313 = vsmask.f32 5396
    %vm314 = vmor %vm312, %vm313
    %vm315 = vsmask.f32 6424
    %vm316 = vmor %vm314, %vm315
    %vm317 = vsmask.f32 7452
    %vm318 = vmor %vm316, %vm317
    %v319 = vshrl.u32 %v263, 16
    %v321 = vrot.slane %v319, 7
    %v322 = vrot.slane %v321, 1
    %v324 = vshll.u32 %v267, 16
    %v326 = vsel %vm318, %v322, %v324
    %v327 = vshrl.u32 %v267, 16
    %v329 = vrot.slane %v327, 7
    %v330 = vrot.slane %v329, 1
    %v332 = vshll.u32 %v271, 16
    %v334 = vsel %vm318, %v330, %v332
    %v335 = vshrl.u32 %v271, 16
    %v337 = vrot.slane %v335, 7
    %v338 = vrot.slane %v337, 1
    %v340 = vshll.u32 %v300, 16
    %v342 = vsel %vm318, %v338, %v340
    %v343 = vshrl.u32 %v274, 16
    %v345 = vrot.slane %v343, 7
    %v346 = vrot.slane %v345, 1
    %v348 = vshll.u32 %v277, 16
    %v350 = vsel %vm318, %v346, %v348
    %v351 = vshrl.u32 %v277, 16
    %v353 = vrot.slane %v351, 7
    %v354 = vrot.slane %v353, 1
    %v356 = vshll.u32 %v280, 16
    %v358 = vsel %vm318, %v354, %v356
    %v359 = vshrl.u32 %v280, 16
    %v361 = vrot.slane %v359, 7
    %v362 = vrot.slane %v361, 1
    %v364 = vshll.u32 %v303, 16
    %v366 = vsel %vm318, %v362, %v364
    %s367 = scalar_lea.vmem %s2, 128
    %v368 = vld [vmem:[%s367] sm:$0xff]
    %v369 = vld [vmem:[%s367 + $0x8] sm:$0xff]
    %v370 = vld [vmem:[%s367 + $0x10] sm:$0xff]
    %v371 = vld [vmem:[%s367 + $0x18] sm:$0xff]
    %v372 = vld [vmem:[%s367 + $0x20] sm:$0xff]
    %v373 = vld [vmem:[%s367 + $0x28] sm:$0xff]
    %v374 = vld [vmem:[%s367 + $0x30] sm:$0xff]
    %v375 = vld [vmem:[%s367 + $0x38] sm:$0xff]
    %v376 = vld [vmem:[%s367 + $0x40] sm:$0xff]
    %v377 = vld [vmem:[%s367 + $0x48] sm:$0xff]
    %v378 = vld [vmem:[%s367 + $0x50] sm:$0xff]
    %v379 = vld [vmem:[%s367 + $0x58] sm:$0xff]
    %v380 = vld [vmem:[%s367 + $0x60] sm:$0xff]
    %v381 = vld [vmem:[%s367 + $0x68] sm:$0xff]
    %v382 = vld [vmem:[%s367 + $0x70] sm:$0xff]
    %v383 = vld [vmem:[%s367 + $0x78] sm:$0xff]
    %385 = vst [vmem:[#allocation1] ss:$9 sm:$0xff] %v326
    %s387 = scalar_lea.vmem [#allocation1], 1
    %388 = vst [vmem:[%s387] ss:$9 sm:$0xff] %v334
    %s390 = scalar_lea.vmem [#allocation1], 2
    %391 = vst [vmem:[%s390] ss:$9 sm:$0xff] %v342
    %s393 = scalar_lea.vmem [#allocation1], 3
    %394 = vst [vmem:[%s393] ss:$9 sm:$0xff] %v350
    %s396 = scalar_lea.vmem [#allocation1], 4
    %397 = vst [vmem:[%s396] ss:$9 sm:$0xff] %v358
    %s399 = scalar_lea.vmem [#allocation1], 5
    %400 = vst [vmem:[%s399] ss:$9 sm:$0xff] %v366
    %v401 = vld [vmem:[#allocation1] sm:$0xff]
    %v419 = vunpack.c.l.b16 %v368
    %v420 = vunpack.c.h.b16 %v368
    %v421 = vunpack.c.l.b16 %v369
    %v422 = vunpack.c.h.b16 %v369
    %v423 = vunpack.c.l.b16 %v370
    %v424 = vunpack.c.h.b16 %v370
    %v425 = vunpack.c.l.b16 %v371
    %v426 = vunpack.c.h.b16 %v371
    %v427 = vunpack.c.l.b16 %v372
    %v428 = vunpack.c.h.b16 %v372
    %v429 = vunpack.c.l.b16 %v373
    %v430 = vunpack.c.h.b16 %v373
    %v431 = vunpack.c.l.b16 %v374
    %v432 = vunpack.c.h.b16 %v374
    %v433 = vunpack.c.l.b16 %v375
    %v434 = vunpack.c.h.b16 %v375
    %v435 = vunpack.c.l.b16 %v376
    %v436 = vunpack.c.h.b16 %v376
    %v437 = vunpack.c.l.b16 %v377
    %v438 = vunpack.c.h.b16 %v377
    %v439 = vunpack.c.l.b16 %v378
    %v440 = vunpack.c.h.b16 %v378
    %v441 = vunpack.c.l.b16 %v379
    %v442 = vunpack.c.h.b16 %v379
    %v443 = vunpack.c.l.b16 %v380
    %v444 = vunpack.c.h.b16 %v380
    %v445 = vunpack.c.l.b16 %v381
    %v446 = vunpack.c.h.b16 %v381
    %v447 = vunpack.c.l.b16 %v382
    %v448 = vunpack.c.h.b16 %v382
    %v449 = vunpack.c.l.b16 %v383
    %v450 = vunpack.c.h.b16 %v383
    %v451 = vpack.c.b16 %v421, %v419
    %v452 = vpack.c.b16 %v422, %v420
    %v453 = vpack.c.b16 %v425, %v423
    %v454 = vpack.c.b16 %v426, %v424
    %v455 = vpack.c.b16 %v429, %v427
    %v456 = vpack.c.b16 %v430, %v428
    %v457 = vpack.c.b16 %v433, %v431
    %v458 = vpack.c.b16 %v434, %v432
    %v459 = vpack.c.b16 %v437, %v435
    %v460 = vpack.c.b16 %v438, %v436
    %v461 = vpack.c.b16 %v441, %v439
    %v462 = vpack.c.b16 %v442, %v440
    %v463 = vpack.c.b16 %v445, %v443
    %v464 = vpack.c.b16 %v446, %v444
    %v465 = vpack.c.b16 %v449, %v447
    %v466 = vpack.c.b16 %v450, %v448
    %483 = vmatpush.bf16.msra.mxu0 %v465
    %484 = vmatpush.bf16.msra.mxu0 %v463
    %485 = vmatpush.bf16.msra.mxu0 %v461
    %486 = vmatpush.bf16.msra.mxu0 %v459
    %487 = vmatpush.bf16.msra.mxu0 %v457
    %488 = vmatpush.bf16.msra.mxu0 %v455
    %489 = vmatpush.bf16.msra.mxu0 %v453
    %490 = vmatpush.bf16.msra.mxu0 %v451
    %491 = vmatmul.bf16.gmra.mxu0 %v401
    %v492 = vpop.f32.mrf.mxu0
    %v493 = vadd.f32 0.0, %v492
    %v494 = vpop.f32.mrf.mxu0
    %v495 = vadd.f32 0.0, %v494
    %496 = vdwg.mxu0
    %497 = vmatpush.bf16.msra.mxu0 %v466
    %498 = vmatpush.bf16.msra.mxu0 %v464
    %499 = vmatpush.bf16.msra.mxu0 %v462
    %500 = vmatpush.bf16.msra.mxu0 %v460
    %501 = vmatpush.bf16.msra.mxu0 %v458
    %502 = vmatpush.bf16.msra.mxu0 %v456
    %503 = vmatpush.bf16.msra.mxu0 %v454
    %504 = vmatpush.bf16.msra.mxu0 %v452
    %505 = vmatmul.bf16.gmra.mxu0 %v401
    %v506 = vpop.f32.mrf.mxu0
    %v507 = vadd.f32 0.0, %v506
    %v508 = vpop.f32.mrf.mxu0
    %v509 = vadd.f32 0.0, %v508
    %510 = vdwg.mxu0
    %511 = vst [vmem:[#allocation1] ss:$9 sm:$0xff] %v263
    %s512 = scalar_lea.vmem [#allocation1], 1
    %513 = vst [vmem:[%s512] ss:$9 sm:$0xff] %v267
    %s514 = scalar_lea.vmem [#allocation1], 2
    %515 = vst [vmem:[%s514] ss:$9 sm:$0xff] %v271
    %s516 = scalar_lea.vmem [#allocation1], 3
    %517 = vst [vmem:[%s516] ss:$9 sm:$0xff] %v274
    %s518 = scalar_lea.vmem [#allocation1], 4
    %519 = vst [vmem:[%s518] ss:$9 sm:$0xff] %v277
    %s520 = scalar_lea.vmem [#allocation1], 5
    %521 = vst [vmem:[%s520] ss:$9 sm:$0xff] %v280
    %v522 = vld [vmem:[#allocation1] sm:$0xff]
    %v540 = vunpack.c.l.b16 %v281
    %v541 = vunpack.c.h.b16 %v281
    %v542 = vunpack.c.l.b16 %v282
    %v543 = vunpack.c.h.b16 %v282
    %v544 = vunpack.c.l.b16 %v283
    %v545 = vunpack.c.h.b16 %v283
    %v546 = vunpack.c.l.b16 %v284
    %v547 = vunpack.c.h.b16 %v284
    %v548 = vunpack.c.l.b16 %v285
    %v549 = vunpack.c.h.b16 %v285
    %v550 = vunpack.c.l.b16 %v286
    %v551 = vunpack.c.h.b16 %v286
    %v552 = vunpack.c.l.b16 %v287
    %v553 = vunpack.c.h.b16 %v287
    %v554 = vunpack.c.l.b16 %v288
    %v555 = vunpack.c.h.b16 %v288
    %v556 = vunpack.c.l.b16 %v289
    %v557 = vunpack.c.h.b16 %v289
    %v558 = vunpack.c.l.b16 %v290
    %v559 = vunpack.c.h.b16 %v290
    %v560 = vunpack.c.l.b16 %v291
    %v561 = vunpack.c.h.b16 %v291
    %v562 = vunpack.c.l.b16 %v292
    %v563 = vunpack.c.h.b16 %v292
    %v564 = vunpack.c.l.b16 %v293
    %v565 = vunpack.c.h.b16 %v293
    %v566 = vunpack.c.l.b16 %v294
    %v567 = vunpack.c.h.b16 %v294
    %v568 = vunpack.c.l.b16 %v295
    %v569 = vunpack.c.h.b16 %v295
    %v570 = vunpack.c.l.b16 %v296
    %v571 = vunpack.c.h.b16 %v296
    %v572 = vpack.c.b16 %v542, %v540
    %v573 = vpack.c.b16 %v543, %v541
    %v574 = vpack.c.b16 %v546, %v544
    %v575 = vpack.c.b16 %v547, %v545
    %v576 = vpack.c.b16 %v550, %v548
    %v577 = vpack.c.b16 %v551, %v549
    %v578 = vpack.c.b16 %v554, %v552
    %v579 = vpack.c.b16 %v555, %v553
    %v580 = vpack.c.b16 %v558, %v556
    %v581 = vpack.c.b16 %v559, %v557
    %v582 = vpack.c.b16 %v562, %v560
    %v583 = vpack.c.b16 %v563, %v561
    %v584 = vpack.c.b16 %v566, %v564
    %v585 = vpack.c.b16 %v567, %v565
    %v586 = vpack.c.b16 %v570, %v568
    %v587 = vpack.c.b16 %v571, %v569
    %604 = vmatpush.bf16.msra.mxu0 %v586
    %605 = vmatpush.bf16.msra.mxu0 %v584
    %606 = vmatpush.bf16.msra.mxu0 %v582
    %607 = vmatpush.bf16.msra.mxu0 %v580
    %608 = vmatpush.bf16.msra.mxu0 %v578
    %609 = vmatpush.bf16.msra.mxu0 %v576
    %610 = vmatpush.bf16.msra.mxu0 %v574
    %611 = vmatpush.bf16.msra.mxu0 %v572
    %612 = vmatmul.bf16.gmra.mxu0 %v522
    %v613 = vpop.f32.mrf.mxu0
    %v614 = vadd.f32 %v493, %v613
    %v615 = vpop.f32.mrf.mxu0
    %v616 = vadd.f32 %v495, %v615
    %617 = vdwg.mxu0
    %618 = vmatpush.bf16.msra.mxu0 %v587
    %619 = vmatpush.bf16.msra.mxu0 %v585
    %620 = vmatpush.bf16.msra.mxu0 %v583
    %621 = vmatpush.bf16.msra.mxu0 %v581
    %622 = vmatpush.bf16.msra.mxu0 %v579
    %623 = vmatpush.bf16.msra.mxu0 %v577
    %624 = vmatpush.bf16.msra.mxu0 %v575
    %625 = vmatpush.bf16.msra.mxu0 %v573
    %626 = vmatmul.bf16.gmra.mxu0 %v522
    %v627 = vpop.f32.mrf.mxu0
    %v628 = vadd.f32 %v507, %v627
    %v629 = vpop.f32.mrf.mxu0
    %v630 = vadd.f32 %v509, %v629
    %631 = vdwg.mxu0
    %632 = vst [vmem:[#allocation1] sm:$0xff] %v254
    %s633 = scalar_lea.vmem [#allocation1], 1
    %v634 = vld [vmem:[%s633] ss:$4 sm:$0xff]
    %s635 = scalar_lea.vmem [#allocation1], 2
    %v636 = vld [vmem:[%s635] ss:$4 sm:$0xff]
    %s637 = scalar_lea.vmem [#allocation1], 3
    %v638 = vld [vmem:[%s637] ss:$4 sm:$0xff]
    %639 = vst [vmem:[#allocation1 + $0x20] sm:$0xff] %v255
    %s640 = scalar_lea.vmem [#allocation1], 33
    %v641 = vld [vmem:[%s640] ss:$4 sm:$0xff]
    %s642 = scalar_lea.vmem [#allocation1], 34
    %v643 = vld [vmem:[%s642] ss:$4 sm:$0xff]
    %s644 = scalar_lea.vmem [#allocation1], 35
    %v645 = vld [vmem:[%s644] ss:$4 sm:$0xff]
    %s646 = scalar_lea.vmem %s2, 256
    %v647 = vld [vmem:[%s646] sm:$0xff]
    %v648 = vld [vmem:[%s646 + $0x8] sm:$0xff]
    %v649 = vld [vmem:[%s646 + $0x10] sm:$0xff]
    %v650 = vld [vmem:[%s646 + $0x18] sm:$0xff]
    %v651 = vld [vmem:[%s646 + $0x20] sm:$0xff]
    %v652 = vld [vmem:[%s646 + $0x28] sm:$0xff]
    %v653 = vld [vmem:[%s646 + $0x30] sm:$0xff]
    %v654 = vld [vmem:[%s646 + $0x38] sm:$0xff]
    %v655 = vld [vmem:[%s646 + $0x40] sm:$0xff]
    %v656 = vld [vmem:[%s646 + $0x48] sm:$0xff]
    %v657 = vld [vmem:[%s646 + $0x50] sm:$0xff]
    %v658 = vld [vmem:[%s646 + $0x58] sm:$0xff]
    %v659 = vld [vmem:[%s646 + $0x60] sm:$0xff]
    %v660 = vld [vmem:[%s646 + $0x68] sm:$0xff]
    %v661 = vld [vmem:[%s646 + $0x70] sm:$0xff]
    %v662 = vld [vmem:[%s646 + $0x78] sm:$0xff]
    %663 = vst [vmem:[#allocation1] ss:$9 sm:$0xff] %v634
    %s664 = scalar_lea.vmem [#allocation1], 1
    %665 = vst [vmem:[%s664] ss:$9 sm:$0xff] %v636
    %s666 = scalar_lea.vmem [#allocation1], 2
    %667 = vst [vmem:[%s666] ss:$9 sm:$0xff] %v638
    %s668 = scalar_lea.vmem [#allocation1], 3
    %669 = vst [vmem:[%s668] ss:$9 sm:$0xff] %v641
    %s670 = scalar_lea.vmem [#allocation1], 4
    %671 = vst [vmem:[%s670] ss:$9 sm:$0xff] %v643
    %s672 = scalar_lea.vmem [#allocation1], 5
    %673 = vst [vmem:[%s672] ss:$9 sm:$0xff] %v645
    %v674 = vld [vmem:[#allocation1] sm:$0xff]
    %v692 = vunpack.c.l.b16 %v647
    %v693 = vunpack.c.h.b16 %v647
    %v694 = vunpack.c.l.b16 %v648
    %v695 = vunpack.c.h.b16 %v648
    %v696 = vunpack.c.l.b16 %v649
    %v697 = vunpack.c.h.b16 %v649
    %v698 = vunpack.c.l.b16 %v650
    %v699 = vunpack.c.h.b16 %v650
    %v700 = vunpack.c.l.b16 %v651
    %v701 = vunpack.c.h.b16 %v651
    %v702 = vunpack.c.l.b16 %v652
    %v703 = vunpack.c.h.b16 %v652
    %v704 = vunpack.c.l.b16 %v653
    %v705 = vunpack.c.h.b16 %v653
    %v706 = vunpack.c.l.b16 %v654
    %v707 = vunpack.c.h.b16 %v654
    %v708 = vunpack.c.l.b16 %v655
    %v709 = vunpack.c.h.b16 %v655
    %v710 = vunpack.c.l.b16 %v656
    %v711 = vunpack.c.h.b16 %v656
    %v712 = vunpack.c.l.b16 %v657
    %v713 = vunpack.c.h.b16 %v657
    %v714 = vunpack.c.l.b16 %v658
    %v715 = vunpack.c.h.b16 %v658
    %v716 = vunpack.c.l.b16 %v659
    %v717 = vunpack.c.h.b16 %v659
    %v718 = vunpack.c.l.b16 %v660
    %v719 = vunpack.c.h.b16 %v660
    %v720 = vunpack.c.l.b16 %v661
    %v721 = vunpack.c.h.b16 %v661
    %v722 = vunpack.c.l.b16 %v662
    %v723 = vunpack.c.h.b16 %v662
    %v724 = vpack.c.b16 %v694, %v692
    %v725 = vpack.c.b16 %v695, %v693
    %v726 = vpack.c.b16 %v698, %v696
    %v727 = vpack.c.b16 %v699, %v697
    %v728 = vpack.c.b16 %v702, %v700
    %v729 = vpack.c.b16 %v703, %v701
    %v730 = vpack.c.b16 %v706, %v704
    %v731 = vpack.c.b16 %v707, %v705
    %v732 = vpack.c.b16 %v710, %v708
    %v733 = vpack.c.b16 %v711, %v709
    %v734 = vpack.c.b16 %v714, %v712
    %v735 = vpack.c.b16 %v715, %v713
    %v736 = vpack.c.b16 %v718, %v716
    %v737 = vpack.c.b16 %v719, %v717
    %v738 = vpack.c.b16 %v722, %v720
    %v739 = vpack.c.b16 %v723, %v721
    %756 = vmatpush.bf16.msra.mxu0 %v738
    %757 = vmatpush.bf16.msra.mxu0 %v736
    %758 = vmatpush.bf16.msra.mxu0 %v734
    %759 = vmatpush.bf16.msra.mxu0 %v732
    %760 = vmatpush.bf16.msra.mxu0 %v730
    %761 = vmatpush.bf16.msra.mxu0 %v728
    %762 = vmatpush.bf16.msra.mxu0 %v726
    %763 = vmatpush.bf16.msra.mxu0 %v724
    %764 = vmatmul.bf16.gmra.mxu0 %v674
    %v765 = vpop.f32.mrf.mxu0
    %v766 = vadd.f32 0.0, %v765
    %v767 = vpop.f32.mrf.mxu0
    %v768 = vadd.f32 0.0, %v767
    %769 = vdwg.mxu0
    %770 = vmatpush.bf16.msra.mxu0 %v739
    %771 = vmatpush.bf16.msra.mxu0 %v737
    %772 = vmatpush.bf16.msra.mxu0 %v735
    %773 = vmatpush.bf16.msra.mxu0 %v733
    %774 = vmatpush.bf16.msra.mxu0 %v731
    %775 = vmatpush.bf16.msra.mxu0 %v729
    %776 = vmatpush.bf16.msra.mxu0 %v727
    %777 = vmatpush.bf16.msra.mxu0 %v725
    %778 = vmatmul.bf16.gmra.mxu0 %v674
    %v779 = vpop.f32.mrf.mxu0
    %v780 = vadd.f32 0.0, %v779
    %v781 = vpop.f32.mrf.mxu0
    %v782 = vadd.f32 0.0, %v781
    %783 = vdwg.mxu0
    %v784 = vadd.f32 %v614, %v766
    %v785 = vadd.f32 %v628, %v780
    %v786 = vadd.f32 %v616, %v768
    %v787 = vadd.f32 %v630, %v782
    %v789 = vperm.slane %v24, 0
    %v790 = vperm.slane %v24, 1
    %v793 = vadd.f32 %v784, %v789
    %v794 = vadd.f32 %v785, %v790
    %v795 = vadd.f32 %v786, %v789
    %v796 = vadd.f32 %v787, %v790
    %v797 = vmax.f32 %v793, 0.0
    %v798 = vmax.f32 %v794, 0.0
    %v799 = vmax.f32 %v795, 0.0
    %v800 = vmax.f32 %v796, 0.0
    %v801 = vpack.c.bf16 %v798, %v797
    %v802 = vpack.c.bf16 %v800, %v799
    %v805 = vrot.slane %v801, 3
    %v806 = vrot.slane %v802, 3
    %v809 = vsel %vm260, %v801, %v805
    %v810 = vsel %vm264, %v801, %v805
    %v812 = vrot.slane %v810, 1
    %v813 = vsel %vm268, %v801, %v805
    %v815 = vrot.slane %v813, 2
    %v816 = vsel %vm297, %v801, %v805
    %v818 = vrot.slane %v816, 3
    %v821 = vsel %vm260, %v802, %v806
    %v822 = vsel %vm264, %v802, %v806
    %v824 = vrot.slane %v822, 1
    %v826 = vperm.slane %v22, 0
    %v828 = vadd.f32 %v826, 0.0
    %v829 = vld [vmem:[%s3] sm:$0xf]
    %v830 = vld [vmem:[%s3 + $0x4] sm:$0xf]
    %v831 = vld [vmem:[%s3 + $0x8] sm:$0xf]
    %v832 = vld [vmem:[%s3 + $0xc] sm:$0xf]
    %v833 = vld [vmem:[%s3 + $0x10] sm:$0xf]
    %v834 = vld [vmem:[%s3 + $0x14] sm:$0xf]
    %v835 = vld [vmem:[%s3 + $0x18] sm:$0xf]
    %v836 = vld [vmem:[%s3 + $0x1c] sm:$0xf]
    %v837 = vld [vmem:[%s3 + $0x20] sm:$0xf]
    %v838 = vld [vmem:[%s3 + $0x24] sm:$0xf]
    %v839 = vld [vmem:[%s3 + $0x28] sm:$0xf]
    %v840 = vld [vmem:[%s3 + $0x2c] sm:$0xf]
    %v841 = vld [vmem:[%s3 + $0x30] sm:$0xf]
    %v842 = vld [vmem:[%s3 + $0x34] sm:$0xf]
    %v843 = vld [vmem:[%s3 + $0x38] sm:$0xf]
    %v844 = vld [vmem:[%s3 + $0x3c] sm:$0xf]
    %v845 = vld [vmem:[%s3 + $0x40] sm:$0xf]
    %v846 = vld [vmem:[%s3 + $0x44] sm:$0xf]
    %v847 = vld [vmem:[%s3 + $0x48] sm:$0xf]
    %v848 = vld [vmem:[%s3 + $0x4c] sm:$0xf]
    %v849 = vld [vmem:[%s3 + $0x50] sm:$0xf]
    %v850 = vld [vmem:[%s3 + $0x54] sm:$0xf]
    %v851 = vld [vmem:[%s3 + $0x58] sm:$0xf]
    %v852 = vld [vmem:[%s3 + $0x5c] sm:$0xf]
    %853 = vst [vmem:[#allocation1] ss:$9 sm:$0xff] %v809
    %v854 = vld [vmem:[#allocation1] sm:$0xff]
    %v856 = vld [vmem:[#allocation1 + $0x9] sm:$0xff]
    %859 = vst [vmem:[#allocation1] ss:$9 sm:$0xff] %v818
    %v860 = vld [vmem:[#allocation1] sm:$0xff]
    %v862 = vld [vmem:[#allocation1 + $0x9] sm:$0xff]
    %v864 = vunpack.c.l.b16 %v854
    %v865 = vunpack.c.l.b16 %v856
    %v866 = vunpack.c.l.b16 %v860
    %v867 = vunpack.c.l.b16 %v862
    %v868 = vrot.slane %v866, 7
    %v869 = vsel %vm264, %v868, %v864
    %v870 = vrot.slane %v867, 7
    %v871 = vsel %vm264, %v870, %v865
    %v872 = vpack.c.b16 %v869, %v869
    %v873 = vpack.c.b16 %v871, %v871
    %v899 = vunpack.c.l.b16 %v829
    %v900 = vunpack.c.l.b16 %v830
    %v901 = vunpack.c.l.b16 %v831
    %v902 = vunpack.c.l.b16 %v832
    %v903 = vunpack.c.l.b16 %v833
    %v904 = vunpack.c.l.b16 %v834
    %v905 = vunpack.c.l.b16 %v835
    %v906 = vunpack.c.l.b16 %v836
    %v907 = vunpack.c.l.b16 %v837
    %v908 = vunpack.c.l.b16 %v838
    %v909 = vunpack.c.l.b16 %v839
    %v910 = vunpack.c.l.b16 %v840
    %v911 = vunpack.c.l.b16 %v841
    %v912 = vunpack.c.l.b16 %v842
    %v913 = vunpack.c.l.b16 %v843
    %v914 = vunpack.c.l.b16 %v844
    %v915 = vunpack.c.l.b16 %v845
    %v916 = vunpack.c.l.b16 %v846
    %v917 = vunpack.c.l.b16 %v847
    %v918 = vunpack.c.l.b16 %v848
    %v919 = vunpack.c.l.b16 %v849
    %v920 = vunpack.c.l.b16 %v850
    %v921 = vunpack.c.l.b16 %v851
    %v922 = vunpack.c.l.b16 %v852
    %v923 = vpack.c.b16 %v900, %v899
    %v924 = vpack.c.b16 %v902, %v901
    %v925 = vpack.c.b16 %v904, %v903
    %v926 = vpack.c.b16 %v906, %v905
    %v927 = vpack.c.b16 %v908, %v907
    %v928 = vpack.c.b16 %v910, %v909
    %v929 = vpack.c.b16 %v912, %v911
    %v930 = vpack.c.b16 %v914, %v913
    %v931 = vpack.c.b16 %v916, %v915
    %v932 = vpack.c.b16 %v918, %v917
    %v933 = vpack.c.b16 %v920, %v919
    %v934 = vpack.c.b16 %v922, %v921
    %vm947 = vcmask 523264
    %v949 = vsel %vm947, %v873, 0
    %951 = vmatpush.bf16.msra.mxu0 %v930
    %952 = vmatpush.bf16.msra.mxu0 %v929
    %953 = vmatpush.bf16.msra.mxu0 %v928
    %954 = vmatpush.bf16.msra.mxu0 %v927
    %955 = vmatpush.bf16.msra.mxu0 %v926
    %956 = vmatpush.bf16.msra.mxu0 %v925
    %957 = vmatpush.bf16.msra.mxu0 %v924
    %958 = vmatpush.bf16.msra.mxu0 %v923
    %959 = vmatmul.bf16.gmra.mxu0 %v872
    %v960 = vpop.f32.mrf.mxu0
    %v961 = vadd.f32 0.0, %v960
    %v962 = vpop.f32.mrf.mxu0
    %963 = vdwg.mxu0
    %964 = vmatpush.bf16.msra.mxu0 0
    %965 = vmatpush.bf16.msra.mxu0 0
    %966 = vmatpush.bf16.msra.mxu0 0
    %967 = vmatpush.bf16.msra.mxu0 0
    %968 = vmatpush.bf16.msra.mxu0 %v934
    %969 = vmatpush.bf16.msra.mxu0 %v933
    %970 = vmatpush.bf16.msra.mxu0 %v932
    %971 = vmatpush.bf16.msra.mxu0 %v931
    %972 = vmatmul.bf16.gmra.mxu0 %v949
    %v973 = vpop.f32.mrf.mxu0
    %v974 = vadd.f32 %v961, %v973
    %v975 = vpop.f32.mrf.mxu0
    %976 = vdwg.mxu0
    %v977 = vadd.f32 %v828, %v974
    %s978 = scalar_lea.vmem %s3, 96
    %v979 = vld [vmem:[%s978] sm:$0xf]
    %v980 = vld [vmem:[%s978 + $0x4] sm:$0xf]
    %v981 = vld [vmem:[%s978 + $0x8] sm:$0xf]
    %v982 = vld [vmem:[%s978 + $0xc] sm:$0xf]
    %v983 = vld [vmem:[%s978 + $0x10] sm:$0xf]
    %v984 = vld [vmem:[%s978 + $0x14] sm:$0xf]
    %v985 = vld [vmem:[%s978 + $0x18] sm:$0xf]
    %v986 = vld [vmem:[%s978 + $0x1c] sm:$0xf]
    %v987 = vld [vmem:[%s978 + $0x20] sm:$0xf]
    %v988 = vld [vmem:[%s978 + $0x24] sm:$0xf]
    %v989 = vld [vmem:[%s978 + $0x28] sm:$0xf]
    %v990 = vld [vmem:[%s978 + $0x2c] sm:$0xf]
    %v991 = vld [vmem:[%s978 + $0x30] sm:$0xf]
    %v992 = vld [vmem:[%s978 + $0x34] sm:$0xf]
    %v993 = vld [vmem:[%s978 + $0x38] sm:$0xf]
    %v994 = vld [vmem:[%s978 + $0x3c] sm:$0xf]
    %v995 = vld [vmem:[%s978 + $0x40] sm:$0xf]
    %v996 = vld [vmem:[%s978 + $0x44] sm:$0xf]
    %v997 = vld [vmem:[%s978 + $0x48] sm:$0xf]
    %v998 = vld [vmem:[%s978 + $0x4c] sm:$0xf]
    %v999 = vld [vmem:[%s978 + $0x50] sm:$0xf]
    %v1000 = vld [vmem:[%s978 + $0x54] sm:$0xf]
    %v1001 = vld [vmem:[%s978 + $0x58] sm:$0xf]
    %v1002 = vld [vmem:[%s978 + $0x5c] sm:$0xf]
    %1003 = vst [vmem:[#allocation1] ss:$9 sm:$0xff] %v809
    %v1004 = vld [vmem:[#allocation1] sm:$0xff]
    %v1006 = vld [vmem:[#allocation1 + $0x9] sm:$0xff]
    %1008 = vst [vmem:[#allocation1] ss:$9 sm:$0xff] %v818
    %v1009 = vld [vmem:[#allocation1] sm:$0xff]
    %v1011 = vld [vmem:[#allocation1 + $0x9] sm:$0xff]
    %v1013 = vunpack.c.l.b16 %v1004
    %v1014 = vunpack.c.l.b16 %v1006
    %v1015 = vunpack.c.l.b16 %v1009
    %v1016 = vunpack.c.l.b16 %v1011
    %v1017 = vrot.slane %v1013, 1
    %v1018 = vsel %vm264, %v1015, %v1017
    %v1019 = vrot.slane %v1014, 1
    %v1020 = vsel %vm264, %v1016, %v1019
    %v1021 = vpack.c.b16 %v1018, %v1018
    %v1022 = vpack.c.b16 %v1020, %v1020
    %v1048 = vunpack.c.l.b16 %v979
    %v1049 = vunpack.c.l.b16 %v980
    %v1050 = vunpack.c.l.b16 %v981
    %v1051 = vunpack.c.l.b16 %v982
    %v1052 = vunpack.c.l.b16 %v983
    %v1053 = vunpack.c.l.b16 %v984
    %v1054 = vunpack.c.l.b16 %v985
    %v1055 = vunpack.c.l.b16 %v986
    %v1056 = vunpack.c.l.b16 %v987
    %v1057 = vunpack.c.l.b16 %v988
    %v1058 = vunpack.c.l.b16 %v989
    %v1059 = vunpack.c.l.b16 %v990
    %v1060 = vunpack.c.l.b16 %v991
    %v1061 = vunpack.c.l.b16 %v992
    %v1062 = vunpack.c.l.b16 %v993
    %v1063 = vunpack.c.l.b16 %v994
    %v1064 = vunpack.c.l.b16 %v995
    %v1065 = vunpack.c.l.b16 %v996
    %v1066 = vunpack.c.l.b16 %v997
    %v1067 = vunpack.c.l.b16 %v998
    %v1068 = vunpack.c.l.b16 %v999
    %v1069 = vunpack.c.l.b16 %v1000
    %v1070 = vunpack.c.l.b16 %v1001
    %v1071 = vunpack.c.l.b16 %v1002
    %v1072 = vpack.c.b16 %v1049, %v1048
    %v1073 = vpack.c.b16 %v1051, %v1050
    %v1074 = vpack.c.b16 %v1053, %v1052
    %v1075 = vpack.c.b16 %v1055, %v1054
    %v1076 = vpack.c.b16 %v1057, %v1056
    %v1077 = vpack.c.b16 %v1059, %v1058
    %v1078 = vpack.c.b16 %v1061, %v1060
    %v1079 = vpack.c.b16 %v1063, %v1062
    %v1080 = vpack.c.b16 %v1065, %v1064
    %v1081 = vpack.c.b16 %v1067, %v1066
    %v1082 = vpack.c.b16 %v1069, %v1068
    %v1083 = vpack.c.b16 %v1071, %v1070
    %v1097 = vsel %vm947, %v1022, 0
    %1099 = vmatpush.bf16.msra.mxu0 %v1079
    %1100 = vmatpush.bf16.msra.mxu0 %v1078
    %1101 = vmatpush.bf16.msra.mxu0 %v1077
    %1102 = vmatpush.bf16.msra.mxu0 %v1076
    %1103 = vmatpush.bf16.msra.mxu0 %v1075
    %1104 = vmatpush.bf16.msra.mxu0 %v1074
    %1105 = vmatpush.bf16.msra.mxu0 %v1073
    %1106 = vmatpush.bf16.msra.mxu0 %v1072
    %1107 = vmatmul.bf16.gmra.mxu0 %v1021
    %v1108 = vpop.f32.mrf.mxu0
    %v1109 = vadd.f32 0.0, %v1108
    %v1110 = vpop.f32.mrf.mxu0
    %1111 = vdwg.mxu0
    %1112 = vmatpush.bf16.msra.mxu0 0
    %1113 = vmatpush.bf16.msra.mxu0 0
    %1114 = vmatpush.bf16.msra.mxu0 0
    %1115 = vmatpush.bf16.msra.mxu0 0
    %1116 = vmatpush.bf16.msra.mxu0 %v1083
    %1117 = vmatpush.bf16.msra.mxu0 %v1082
    %1118 = vmatpush.bf16.msra.mxu0 %v1081
    %1119 = vmatpush.bf16.msra.mxu0 %v1080
    %1120 = vmatmul.bf16.gmra.mxu0 %v1097
    %v1121 = vpop.f32.mrf.mxu0
    %v1122 = vadd.f32 %v1109, %v1121
    %v1123 = vpop.f32.mrf.mxu0
    %1124 = vdwg.mxu0
    %v1125 = vadd.f32 %v977, %v1122
    %s1126 = scalar_lea.vmem %s3, 192
    %v1127 = vld [vmem:[%s1126] sm:$0xf]
    %v1128 = vld [vmem:[%s1126 + $0x4] sm:$0xf]
    %v1129 = vld [vmem:[%s1126 + $0x8] sm:$0xf]
    %v1130 = vld [vmem:[%s1126 + $0xc] sm:$0xf]
    %v1131 = vld [vmem:[%s1126 + $0x10] sm:$0xf]
    %v1132 = vld [vmem:[%s1126 + $0x14] sm:$0xf]
    %v1133 = vld [vmem:[%s1126 + $0x18] sm:$0xf]
    %v1134 = vld [vmem:[%s1126 + $0x1c] sm:$0xf]
    %v1135 = vld [vmem:[%s1126 + $0x20] sm:$0xf]
    %v1136 = vld [vmem:[%s1126 + $0x24] sm:$0xf]
    %v1137 = vld [vmem:[%s1126 + $0x28] sm:$0xf]
    %v1138 = vld [vmem:[%s1126 + $0x2c] sm:$0xf]
    %v1139 = vld [vmem:[%s1126 + $0x30] sm:$0xf]
    %v1140 = vld [vmem:[%s1126 + $0x34] sm:$0xf]
    %v1141 = vld [vmem:[%s1126 + $0x38] sm:$0xf]
    %v1142 = vld [vmem:[%s1126 + $0x3c] sm:$0xf]
    %v1143 = vld [vmem:[%s1126 + $0x40] sm:$0xf]
    %v1144 = vld [vmem:[%s1126 + $0x44] sm:$0xf]
    %v1145 = vld [vmem:[%s1126 + $0x48] sm:$0xf]
    %v1146 = vld [vmem:[%s1126 + $0x4c] sm:$0xf]
    %v1147 = vld [vmem:[%s1126 + $0x50] sm:$0xf]
    %v1148 = vld [vmem:[%s1126 + $0x54] sm:$0xf]
    %v1149 = vld [vmem:[%s1126 + $0x58] sm:$0xf]
    %v1150 = vld [vmem:[%s1126 + $0x5c] sm:$0xf]
    %1152 = vst [vmem:[#allocation1] ss:$9 sm:$0xff] %v812
    %v1153 = vld [vmem:[#allocation1] sm:$0xff]
    %v1155 = vld [vmem:[#allocation1 + $0x9] sm:$0xff]
    %1157 = vst [vmem:[#allocation1] ss:$9 sm:$0xff] %v821
    %v1158 = vld [vmem:[#allocation1] sm:$0xff]
    %v1160 = vld [vmem:[#allocation1 + $0x9] sm:$0xff]
    %v1162 = vunpack.c.l.b16 %v1153
    %v1163 = vunpack.c.l.b16 %v1155
    %v1164 = vunpack.c.l.b16 %v1158
    %v1165 = vunpack.c.l.b16 %v1160
    %v1166 = vrot.slane %v1164, 7
    %v1167 = vsel %vm264, %v1166, %v1162
    %v1168 = vrot.slane %v1165, 7
    %v1169 = vsel %vm264, %v1168, %v1163
    %v1170 = vpack.c.b16 %v1167, %v1167
    %v1171 = vpack.c.b16 %v1169, %v1169
    %v1197 = vunpack.c.l.b16 %v1127
    %v1198 = vunpack.c.l.b16 %v1128
    %v1199 = vunpack.c.l.b16 %v1129
    %v1200 = vunpack.c.l.b16 %v1130
    %v1201 = vunpack.c.l.b16 %v1131
    %v1202 = vunpack.c.l.b16 %v1132
    %v1203 = vunpack.c.l.b16 %v1133
    %v1204 = vunpack.c.l.b16 %v1134
    %v1205 = vunpack.c.l.b16 %v1135
    %v1206 = vunpack.c.l.b16 %v1136
    %v1207 = vunpack.c.l.b16 %v1137
    %v1208 = vunpack.c.l.b16 %v1138
    %v1209 = vunpack.c.l.b16 %v1139
    %v1210 = vunpack.c.l.b16 %v1140
    %v1211 = vunpack.c.l.b16 %v1141
    %v1212 = vunpack.c.l.b16 %v1142
    %v1213 = vunpack.c.l.b16 %v1143
    %v1214 = vunpack.c.l.b16 %v1144
    %v1215 = vunpack.c.l.b16 %v1145
    %v1216 = vunpack.c.l.b16 %v1146
    %v1217 = vunpack.c.l.b16 %v1147
    %v1218 = vunpack.c.l.b16 %v1148
    %v1219 = vunpack.c.l.b16 %v1149
    %v1220 = vunpack.c.l.b16 %v1150
    %v1221 = vpack.c.b16 %v1198, %v1197
    %v1222 = vpack.c.b16 %v1200, %v1199
    %v1223 = vpack.c.b16 %v1202, %v1201
    %v1224 = vpack.c.b16 %v1204, %v1203
    %v1225 = vpack.c.b16 %v1206, %v1205
    %v1226 = vpack.c.b16 %v1208, %v1207
    %v1227 = vpack.c.b16 %v1210, %v1209
    %v1228 = vpack.c.b16 %v1212, %v1211
    %v1229 = vpack.c.b16 %v1214, %v1213
    %v1230 = vpack.c.b16 %v1216, %v1215
    %v1231 = vpack.c.b16 %v1218, %v1217
    %v1232 = vpack.c.b16 %v1220, %v1219
    %v1246 = vsel %vm947, %v1171, 0
    %1248 = vmatpush.bf16.msra.mxu0 %v1228
    %1249 = vmatpush.bf16.msra.mxu0 %v1227
    %1250 = vmatpush.bf16.msra.mxu0 %v1226
    %1251 = vmatpush.bf16.msra.mxu0 %v1225
    %1252 = vmatpush.bf16.msra.mxu0 %v1224
    %1253 = vmatpush.bf16.msra.mxu0 %v1223
    %1254 = vmatpush.bf16.msra.mxu0 %v1222
    %1255 = vmatpush.bf16.msra.mxu0 %v1221
    %1256 = vmatmul.bf16.gmra.mxu0 %v1170
    %v1257 = vpop.f32.mrf.mxu0
    %v1258 = vadd.f32 0.0, %v1257
    %v1259 = vpop.f32.mrf.mxu0
    %1260 = vdwg.mxu0
    %1261 = vmatpush.bf16.msra.mxu0 0
    %1262 = vmatpush.bf16.msra.mxu0 0
    %1263 = vmatpush.bf16.msra.mxu0 0
    %1264 = vmatpush.bf16.msra.mxu0 0
    %1265 = vmatpush.bf16.msra.mxu0 %v1232
    %1266 = vmatpush.bf16.msra.mxu0 %v1231
    %1267 = vmatpush.bf16.msra.mxu0 %v1230
    %1268 = vmatpush.bf16.msra.mxu0 %v1229
    %1269 = vmatmul.bf16.gmra.mxu0 %v1246
    %v1270 = vpop.f32.mrf.mxu0
    %v1271 = vadd.f32 %v1258, %v1270
    %v1272 = vpop.f32.mrf.mxu0
    %1273 = vdwg.mxu0
    %v1274 = vadd.f32 %v1125, %v1271
    %s1275 = scalar_lea.vmem %s3, 288
    %v1276 = vld [vmem:[%s1275] sm:$0xf]
    %v1277 = vld [vmem:[%s1275 + $0x4] sm:$0xf]
    %v1278 = vld [vmem:[%s1275 + $0x8] sm:$0xf]
    %v1279 = vld [vmem:[%s1275 + $0xc] sm:$0xf]
    %v1280 = vld [vmem:[%s1275 + $0x10] sm:$0xf]
    %v1281 = vld [vmem:[%s1275 + $0x14] sm:$0xf]
    %v1282 = vld [vmem:[%s1275 + $0x18] sm:$0xf]
    %v1283 = vld [vmem:[%s1275 + $0x1c] sm:$0xf]
    %v1284 = vld [vmem:[%s1275 + $0x20] sm:$0xf]
    %v1285 = vld [vmem:[%s1275 + $0x24] sm:$0xf]
    %v1286 = vld [vmem:[%s1275 + $0x28] sm:$0xf]
    %v1287 = vld [vmem:[%s1275 + $0x2c] sm:$0xf]
    %v1288 = vld [vmem:[%s1275 + $0x30] sm:$0xf]
    %v1289 = vld [vmem:[%s1275 + $0x34] sm:$0xf]
    %v1290 = vld [vmem:[%s1275 + $0x38] sm:$0xf]
    %v1291 = vld [vmem:[%s1275 + $0x3c] sm:$0xf]
    %v1292 = vld [vmem:[%s1275 + $0x40] sm:$0xf]
    %v1293 = vld [vmem:[%s1275 + $0x44] sm:$0xf]
    %v1294 = vld [vmem:[%s1275 + $0x48] sm:$0xf]
    %v1295 = vld [vmem:[%s1275 + $0x4c] sm:$0xf]
    %v1296 = vld [vmem:[%s1275 + $0x50] sm:$0xf]
    %v1297 = vld [vmem:[%s1275 + $0x54] sm:$0xf]
    %v1298 = vld [vmem:[%s1275 + $0x58] sm:$0xf]
    %v1299 = vld [vmem:[%s1275 + $0x5c] sm:$0xf]
    %1300 = vst [vmem:[#allocation1] ss:$9 sm:$0xff] %v812
    %v1301 = vld [vmem:[#allocation1] sm:$0xff]
    %v1303 = vld [vmem:[#allocation1 + $0x9] sm:$0xff]
    %1305 = vst [vmem:[#allocation1] ss:$9 sm:$0xff] %v821
    %v1306 = vld [vmem:[#allocation1] sm:$0xff]
    %v1308 = vld [vmem:[#allocation1 + $0x9] sm:$0xff]
    %v1310 = vunpack.c.l.b16 %v1301
    %v1311 = vunpack.c.l.b16 %v1303
    %v1312 = vunpack.c.l.b16 %v1306
    %v1313 = vunpack.c.l.b16 %v1308
    %v1314 = vrot.slane %v1310, 1
    %v1315 = vsel %vm264, %v1312, %v1314
    %v1316 = vrot.slane %v1311, 1
    %v1317 = vsel %vm264, %v1313, %v1316
    %v1318 = vpack.c.b16 %v1315, %v1315
    %v1319 = vpack.c.b16 %v1317, %v1317
    %v1345 = vunpack.c.l.b16 %v1276
    %v1346 = vunpack.c.l.b16 %v1277
    %v1347 = vunpack.c.l.b16 %v1278
    %v1348 = vunpack.c.l.b16 %v1279
    %v1349 = vunpack.c.l.b16 %v1280
    %v1350 = vunpack.c.l.b16 %v1281
    %v1351 = vunpack.c.l.b16 %v1282
    %v1352 = vunpack.c.l.b16 %v1283
    %v1353 = vunpack.c.l.b16 %v1284
    %v1354 = vunpack.c.l.b16 %v1285
    %v1355 = vunpack.c.l.b16 %v1286
    %v1356 = vunpack.c.l.b16 %v1287
    %v1357 = vunpack.c.l.b16 %v1288
    %v1358 = vunpack.c.l.b16 %v1289
    %v1359 = vunpack.c.l.b16 %v1290
    %v1360 = vunpack.c.l.b16 %v1291
    %v1361 = vunpack.c.l.b16 %v1292
    %v1362 = vunpack.c.l.b16 %v1293
    %v1363 = vunpack.c.l.b16 %v1294
    %v1364 = vunpack.c.l.b16 %v1295
    %v1365 = vunpack.c.l.b16 %v1296
    %v1366 = vunpack.c.l.b16 %v1297
    %v1367 = vunpack.c.l.b16 %v1298
    %v1368 = vunpack.c.l.b16 %v1299
    %v1369 = vpack.c.b16 %v1346, %v1345
    %v1370 = vpack.c.b16 %v1348, %v1347
    %v1371 = vpack.c.b16 %v1350, %v1349
    %v1372 = vpack.c.b16 %v1352, %v1351
    %v1373 = vpack.c.b16 %v1354, %v1353
    %v1374 = vpack.c.b16 %v1356, %v1355
    %v1375 = vpack.c.b16 %v1358, %v1357
    %v1376 = vpack.c.b16 %v1360, %v1359
    %v1377 = vpack.c.b16 %v1362, %v1361
    %v1378 = vpack.c.b16 %v1364, %v1363
    %v1379 = vpack.c.b16 %v1366, %v1365
    %v1380 = vpack.c.b16 %v1368, %v1367
    %v1394 = vsel %vm947, %v1319, 0
    %1396 = vmatpush.bf16.msra.mxu0 %v1376
    %1397 = vmatpush.bf16.msra.mxu0 %v1375
    %1398 = vmatpush.bf16.msra.mxu0 %v1374
    %1399 = vmatpush.bf16.msra.mxu0 %v1373
    %1400 = vmatpush.bf16.msra.mxu0 %v1372
    %1401 = vmatpush.bf16.msra.mxu0 %v1371
    %1402 = vmatpush.bf16.msra.mxu0 %v1370
    %1403 = vmatpush.bf16.msra.mxu0 %v1369
    %1404 = vmatmul.bf16.gmra.mxu0 %v1318
    %v1405 = vpop.f32.mrf.mxu0
    %v1406 = vadd.f32 0.0, %v1405
    %v1407 = vpop.f32.mrf.mxu0
    %1408 = vdwg.mxu0
    %1409 = vmatpush.bf16.msra.mxu0 0
    %1410 = vmatpush.bf16.msra.mxu0 0
    %1411 = vmatpush.bf16.msra.mxu0 0
    %1412 = vmatpush.bf16.msra.mxu0 0
    %1413 = vmatpush.bf16.msra.mxu0 %v1380
    %1414 = vmatpush.bf16.msra.mxu0 %v1379
    %1415 = vmatpush.bf16.msra.mxu0 %v1378
    %1416 = vmatpush.bf16.msra.mxu0 %v1377
    %1417 = vmatmul.bf16.gmra.mxu0 %v1394
    %v1418 = vpop.f32.mrf.mxu0
    %v1419 = vadd.f32 %v1406, %v1418
    %v1420 = vpop.f32.mrf.mxu0
    %1421 = vdwg.mxu0
    %v1422 = vadd.f32 %v1274, %v1419
    %s1423 = scalar_lea.vmem %s3, 384
    %v1424 = vld [vmem:[%s1423] sm:$0xf]
    %v1425 = vld [vmem:[%s1423 + $0x4] sm:$0xf]
    %v1426 = vld [vmem:[%s1423 + $0x8] sm:$0xf]
    %v1427 = vld [vmem:[%s1423 + $0xc] sm:$0xf]
    %v1428 = vld [vmem:[%s1423 + $0x10] sm:$0xf]
    %v1429 = vld [vmem:[%s1423 + $0x14] sm:$0xf]
    %v1430 = vld [vmem:[%s1423 + $0x18] sm:$0xf]
    %v1431 = vld [vmem:[%s1423 + $0x1c] sm:$0xf]
    %v1432 = vld [vmem:[%s1423 + $0x20] sm:$0xf]
    %v1433 = vld [vmem:[%s1423 + $0x24] sm:$0xf]
    %v1434 = vld [vmem:[%s1423 + $0x28] sm:$0xf]
    %v1435 = vld [vmem:[%s1423 + $0x2c] sm:$0xf]
    %v1436 = vld [vmem:[%s1423 + $0x30] sm:$0xf]
    %v1437 = vld [vmem:[%s1423 + $0x34] sm:$0xf]
    %v1438 = vld [vmem:[%s1423 + $0x38] sm:$0xf]
    %v1439 = vld [vmem:[%s1423 + $0x3c] sm:$0xf]
    %v1440 = vld [vmem:[%s1423 + $0x40] sm:$0xf]
    %v1441 = vld [vmem:[%s1423 + $0x44] sm:$0xf]
    %v1442 = vld [vmem:[%s1423 + $0x48] sm:$0xf]
    %v1443 = vld [vmem:[%s1423 + $0x4c] sm:$0xf]
    %v1444 = vld [vmem:[%s1423 + $0x50] sm:$0xf]
    %v1445 = vld [vmem:[%s1423 + $0x54] sm:$0xf]
    %v1446 = vld [vmem:[%s1423 + $0x58] sm:$0xf]
    %v1447 = vld [vmem:[%s1423 + $0x5c] sm:$0xf]
    %1449 = vst [vmem:[#allocation1] ss:$9 sm:$0xff] %v815
    %v1450 = vld [vmem:[#allocation1] sm:$0xff]
    %v1452 = vld [vmem:[#allocation1 + $0x9] sm:$0xff]
    %1455 = vst [vmem:[#allocation1] ss:$9 sm:$0xff] %v824
    %v1456 = vld [vmem:[#allocation1] sm:$0xff]
    %v1458 = vld [vmem:[#allocation1 + $0x9] sm:$0xff]
    %v1460 = vunpack.c.l.b16 %v1450
    %v1461 = vunpack.c.l.b16 %v1452
    %v1462 = vunpack.c.l.b16 %v1456
    %v1463 = vunpack.c.l.b16 %v1458
    %v1464 = vrot.slane %v1462, 7
    %v1465 = vsel %vm264, %v1464, %v1460
    %v1466 = vrot.slane %v1463, 7
    %v1467 = vsel %vm264, %v1466, %v1461
    %v1468 = vpack.c.b16 %v1465, %v1465
    %v1469 = vpack.c.b16 %v1467, %v1467
    %v1495 = vunpack.c.l.b16 %v1424
    %v1496 = vunpack.c.l.b16 %v1425
    %v1497 = vunpack.c.l.b16 %v1426
    %v1498 = vunpack.c.l.b16 %v1427
    %v1499 = vunpack.c.l.b16 %v1428
    %v1500 = vunpack.c.l.b16 %v1429
    %v1501 = vunpack.c.l.b16 %v1430
    %v1502 = vunpack.c.l.b16 %v1431
    %v1503 = vunpack.c.l.b16 %v1432
    %v1504 = vunpack.c.l.b16 %v1433
    %v1505 = vunpack.c.l.b16 %v1434
    %v1506 = vunpack.c.l.b16 %v1435
    %v1507 = vunpack.c.l.b16 %v1436
    %v1508 = vunpack.c.l.b16 %v1437
    %v1509 = vunpack.c.l.b16 %v1438
    %v1510 = vunpack.c.l.b16 %v1439
    %v1511 = vunpack.c.l.b16 %v1440
    %v1512 = vunpack.c.l.b16 %v1441
    %v1513 = vunpack.c.l.b16 %v1442
    %v1514 = vunpack.c.l.b16 %v1443
    %v1515 = vunpack.c.l.b16 %v1444
    %v1516 = vunpack.c.l.b16 %v1445
    %v1517 = vunpack.c.l.b16 %v1446
    %v1518 = vunpack.c.l.b16 %v1447
    %v1519 = vpack.c.b16 %v1496, %v1495
    %v1520 = vpack.c.b16 %v1498, %v1497
    %v1521 = vpack.c.b16 %v1500, %v1499
    %v1522 = vpack.c.b16 %v1502, %v1501
    %v1523 = vpack.c.b16 %v1504, %v1503
    %v1524 = vpack.c.b16 %v1506, %v1505
    %v1525 = vpack.c.b16 %v1508, %v1507
    %v1526 = vpack.c.b16 %v1510, %v1509
    %v1527 = vpack.c.b16 %v1512, %v1511
    %v1528 = vpack.c.b16 %v1514, %v1513
    %v1529 = vpack.c.b16 %v1516, %v1515
    %v1530 = vpack.c.b16 %v1518, %v1517
    %v1544 = vsel %vm947, %v1469, 0
    %1546 = vmatpush.bf16.msra.mxu0 %v1526
    %1547 = vmatpush.bf16.msra.mxu0 %v1525
    %1548 = vmatpush.bf16.msra.mxu0 %v1524
    %1549 = vmatpush.bf16.msra.mxu0 %v1523
    %1550 = vmatpush.bf16.msra.mxu0 %v1522
    %1551 = vmatpush.bf16.msra.mxu0 %v1521
    %1552 = vmatpush.bf16.msra.mxu0 %v1520
    %1553 = vmatpush.bf16.msra.mxu0 %v1519
    %1554 = vmatmul.bf16.gmra.mxu0 %v1468
    %v1555 = vpop.f32.mrf.mxu0
    %v1556 = vadd.f32 0.0, %v1555
    %v1557 = vpop.f32.mrf.mxu0
    %1558 = vdwg.mxu0
    %1559 = vmatpush.bf16.msra.mxu0 0
    %1560 = vmatpush.bf16.msra.mxu0 0
    %1561 = vmatpush.bf16.msra.mxu0 0
    %1562 = vmatpush.bf16.msra.mxu0 0
    %1563 = vmatpush.bf16.msra.mxu0 %v1530
    %1564 = vmatpush.bf16.msra.mxu0 %v1529
    %1565 = vmatpush.bf16.msra.mxu0 %v1528
    %1566 = vmatpush.bf16.msra.mxu0 %v1527
    %1567 = vmatmul.bf16.gmra.mxu0 %v1544
    %v1568 = vpop.f32.mrf.mxu0
    %v1569 = vadd.f32 %v1556, %v1568
    %v1570 = vpop.f32.mrf.mxu0
    %1571 = vdwg.mxu0
    %v1572 = vadd.f32 %v1422, %v1569
    %s1573 = scalar_lea.vmem %s3, 480
    %v1574 = vld [vmem:[%s1573] sm:$0xf]
    %v1575 = vld [vmem:[%s1573 + $0x4] sm:$0xf]
    %v1576 = vld [vmem:[%s1573 + $0x8] sm:$0xf]
    %v1577 = vld [vmem:[%s1573 + $0xc] sm:$0xf]
    %v1578 = vld [vmem:[%s1573 + $0x10] sm:$0xf]
    %v1579 = vld [vmem:[%s1573 + $0x14] sm:$0xf]
    %v1580 = vld [vmem:[%s1573 + $0x18] sm:$0xf]
    %v1581 = vld [vmem:[%s1573 + $0x1c] sm:$0xf]
    %v1582 = vld [vmem:[%s1573 + $0x20] sm:$0xf]
    %v1583 = vld [vmem:[%s1573 + $0x24] sm:$0xf]
    %v1584 = vld [vmem:[%s1573 + $0x28] sm:$0xf]
    %v1585 = vld [vmem:[%s1573 + $0x2c] sm:$0xf]
    %v1586 = vld [vmem:[%s1573 + $0x30] sm:$0xf]
    %v1587 = vld [vmem:[%s1573 + $0x34] sm:$0xf]
    %v1588 = vld [vmem:[%s1573 + $0x38] sm:$0xf]
    %v1589 = vld [vmem:[%s1573 + $0x3c] sm:$0xf]
    %v1590 = vld [vmem:[%s1573 + $0x40] sm:$0xf]
    %v1591 = vld [vmem:[%s1573 + $0x44] sm:$0xf]
    %v1592 = vld [vmem:[%s1573 + $0x48] sm:$0xf]
    %v1593 = vld [vmem:[%s1573 + $0x4c] sm:$0xf]
    %v1594 = vld [vmem:[%s1573 + $0x50] sm:$0xf]
    %v1595 = vld [vmem:[%s1573 + $0x54] sm:$0xf]
    %v1596 = vld [vmem:[%s1573 + $0x58] sm:$0xf]
    %v1597 = vld [vmem:[%s1573 + $0x5c] sm:$0xf]
    %1598 = vst [vmem:[#allocation1] ss:$9 sm:$0xff] %v815
    %v1599 = vld [vmem:[#allocation1] sm:$0xff]
    %v1601 = vld [vmem:[#allocation1 + $0x9] sm:$0xff]
    %1603 = vst [vmem:[#allocation1] ss:$9 sm:$0xff] %v824
    %v1604 = vld [vmem:[#allocation1] sm:$0xff]
    %v1606 = vld [vmem:[#allocation1 + $0x9] sm:$0xff]
    %v1608 = vunpack.c.l.b16 %v1599
    %v1609 = vunpack.c.l.b16 %v1601
    %v1610 = vunpack.c.l.b16 %v1604
    %v1611 = vunpack.c.l.b16 %v1606
    %v1612 = vrot.slane %v1608, 1
    %v1613 = vsel %vm264, %v1610, %v1612
    %v1614 = vrot.slane %v1609, 1
    %v1615 = vsel %vm264, %v1611, %v1614
    %v1616 = vpack.c.b16 %v1613, %v1613
    %v1617 = vpack.c.b16 %v1615, %v1615
    %v1643 = vunpack.c.l.b16 %v1574
    %v1644 = vunpack.c.l.b16 %v1575
    %v1645 = vunpack.c.l.b16 %v1576
    %v1646 = vunpack.c.l.b16 %v1577
    %v1647 = vunpack.c.l.b16 %v1578
    %v1648 = vunpack.c.l.b16 %v1579
    %v1649 = vunpack.c.l.b16 %v1580
    %v1650 = vunpack.c.l.b16 %v1581
    %v1651 = vunpack.c.l.b16 %v1582
    %v1652 = vunpack.c.l.b16 %v1583
    %v1653 = vunpack.c.l.b16 %v1584
    %v1654 = vunpack.c.l.b16 %v1585
    %v1655 = vunpack.c.l.b16 %v1586
    %v1656 = vunpack.c.l.b16 %v1587
    %v1657 = vunpack.c.l.b16 %v1588
    %v1658 = vunpack.c.l.b16 %v1589
    %v1659 = vunpack.c.l.b16 %v1590
    %v1660 = vunpack.c.l.b16 %v1591
    %v1661 = vunpack.c.l.b16 %v1592
    %v1662 = vunpack.c.l.b16 %v1593
    %v1663 = vunpack.c.l.b16 %v1594
    %v1664 = vunpack.c.l.b16 %v1595
    %v1665 = vunpack.c.l.b16 %v1596
    %v1666 = vunpack.c.l.b16 %v1597
    %v1667 = vpack.c.b16 %v1644, %v1643
    %v1668 = vpack.c.b16 %v1646, %v1645
    %v1669 = vpack.c.b16 %v1648, %v1647
    %v1670 = vpack.c.b16 %v1650, %v1649
    %v1671 = vpack.c.b16 %v1652, %v1651
    %v1672 = vpack.c.b16 %v1654, %v1653
    %v1673 = vpack.c.b16 %v1656, %v1655
    %v1674 = vpack.c.b16 %v1658, %v1657
    %v1675 = vpack.c.b16 %v1660, %v1659
    %v1676 = vpack.c.b16 %v1662, %v1661
    %v1677 = vpack.c.b16 %v1664, %v1663
    %v1678 = vpack.c.b16 %v1666, %v1665
    %v1692 = vsel %vm947, %v1617, 0
    %1694 = vmatpush.bf16.msra.mxu0 %v1674
    %1695 = vmatpush.bf16.msra.mxu0 %v1673
    %1696 = vmatpush.bf16.msra.mxu0 %v1672
    %1697 = vmatpush.bf16.msra.mxu0 %v1671
    %1698 = vmatpush.bf16.msra.mxu0 %v1670
    %1699 = vmatpush.bf16.msra.mxu0 %v1669
    %1700 = vmatpush.bf16.msra.mxu0 %v1668
    %1701 = vmatpush.bf16.msra.mxu0 %v1667
    %1702 = vmatmul.bf16.gmra.mxu0 %v1616
    %v1703 = vpop.f32.mrf.mxu0
    %v1704 = vadd.f32 0.0, %v1703
    %v1705 = vpop.f32.mrf.mxu0
    %1706 = vdwg.mxu0
    %1707 = vmatpush.bf16.msra.mxu0 0
    %1708 = vmatpush.bf16.msra.mxu0 0
    %1709 = vmatpush.bf16.msra.mxu0 0
    %1710 = vmatpush.bf16.msra.mxu0 0
    %1711 = vmatpush.bf16.msra.mxu0 %v1678
    %1712 = vmatpush.bf16.msra.mxu0 %v1677
    %1713 = vmatpush.bf16.msra.mxu0 %v1676
    %1714 = vmatpush.bf16.msra.mxu0 %v1675
    %1715 = vmatmul.bf16.gmra.mxu0 %v1692
    %v1716 = vpop.f32.mrf.mxu0
    %v1717 = vadd.f32 %v1704, %v1716
    %v1718 = vpop.f32.mrf.mxu0
    %1719 = vdwg.mxu0
    %v1720 = vadd.f32 %v1572, %v1717
    %vm1721 = vcmask 41984
    %v1722 = vsel %vm1721, %v1720, -inf
    %1723 = vmax.xlane.f32.xlu0 %v1722
    %v1724 = vpop.xlane.xlu0 %1723
    %v1725 = vsub.f32 %v1720, %v1724
    %v1726 = vmul.f32 %v1725, 1.442695
    %v1727 = vpow.pop %v1726
    %v1728 = vsel %vm1721, %v1727, 0.0
    %1729 = vadd.xlane.f32.xlu0 %v1728
    %v1730 = vpop.xlane.xlu0 %1729
    %v1731 = vrcp.pop %v1730
    %v1732 = vmul.f32 %v1730, %v1731
    %v1733 = vsub.f32 1.0, %v1732
    %v1734 = vmul.f32 %v1731, %v1733
    %v1735 = vadd.f32 %v1731, %v1734
    %vm1736 = vweird.f32 %v1730
    %vm1737 = vweird.f32 %v1731
    %vm1738 = vmor %vm1736, %vm1737
    %v1739 = vsel %vm1738, %v1731, %v1735
    %v1740 = vand.u32 2147483647, %v1730
    %vm1741 = vcmp.eq.f32.partialorder %v1740, 8.507059e+37
    %v1742 = vand.u32 %v1730, 2147483648
    %v1743 = vor.u32 1.1754944e-38, %v1742
    %v1744 = vsel %vm1741, %v1743, %v1739
    %v1745 = vmul.f32 %v1727, %v1744
    %1746 = vst.msk [vmem:[#allocation2] sm:$0x3] %vm1721, %v1745
    // Predicated region
    $region22: #{dqn_forward.1} parent=1 // pred_check
      _
    $region23: #{dqn_forward.1} parent=1 // pred_check_branch
      %1748 = sbr.rel (0) target = $region25
    $region24: #{dqn_forward.1} parent=1 // pred_region
      %1750 = vsyncadd [#allocation3], 0
      %s1752 = sshll.u32 [#allocation2], 4
      %s1753 = int_to_ptr.vmem [resolvable:$true] %s1752
      %s1754 = sshll.u32 %s5, 4
      %s1755 = int_to_ptr.hbm [resolvable:$true] %s1754
      %1757 = dma.vmem_to_hbm [thread:$0]  %s1753, 32, %s1755, [#allocation3]
    $region25: #{dqn_forward.1} parent=1 // pred_fallthru
      _
    // Predicated region
    $region26: #{dqn_forward.1} parent=1 // pred_check
      _
    $region27: #{dqn_forward.1} parent=1 // pred_check_branch
      %1759 = sbr.rel (0) target = $region29
    $region28: #{dqn_forward.1} parent=1 // pred_region
      %1761 = dma.done [#allocation3], 32
    $region29: #{dqn_forward.1} parent=1 // pred_fallthru
      _
    %1762 = vsyncpa [#allocation3], 1

</llo_original>
